<compile_context>
chip_gen: v5e
topology: v5e:2x2
jax: 0.10.0
libtpu: 0.0.40
codegen_flags: <defaults>
</compile_context>

<pallas_src>
import jax
import jax.numpy as jnp
from jax.experimental import pallas as pl
from jax.experimental.pallas import tpu as pltpu

IN_FEATS = 28 * 28      # 784  (multiple of 8 -> valid sublane dim for W1)
HIDDEN = 512
OUT_FEATS = 10
OUT_PAD = 128           # lane-dense minor dim for the logits store
MAX_TILE_B = 512        # cap keeps v5e's default scoped VMEM comfortable


def _round_up(n, m):
    return ((n + m - 1) // m) * m


def _pick_tile_b(batch):
    # Tiny batches: one small tile; don't pad B=4 up to hundreds of rows.
    if batch <= 16:
        return _round_up(batch, 8)
    # Otherwise aim for >= 2 grid tiles (so v7x's two TensorCores both get
    # work), keep the tile a multiple of 16 (so an in-kernel 2-way M split
    # stays sublane aligned), and cap at MAX_TILE_B for v5e scoped VMEM.
    tile = _round_up((batch + 1) // 2, 16)
    return min(MAX_TILE_B, tile)


def _make_kernel(tile_b, n_sub):
    sub = tile_b // n_sub

    def mlp_kernel(x_ref, w1_ref, b1_ref, w2_ref, b2_ref, w3_ref, b3_ref, o_ref):
        # Static sub-tile loop over the batch (M) dim: the f32 bias/ReLU/cast
        # epilogue of sub-tile s overlaps the MXU matmuls of sub-tile s+1.
        for s in range(n_sub):
            rows = pl.ds(s * sub, sub)
            # x arrives f32 straight from HBM; bf16 cast here is free VPU
            # filler under the MXU and avoids a separate wrapper pass.
            xs = x_ref[rows, :].astype(jnp.bfloat16)
            # Layer 1: Linear(784 -> 512) + ReLU.  bf16 MXU, f32 accumulate,
            # bias-add/ReLU in f32 (v5e VPU has no bf16 ALUs), one cast back.
            h1 = jnp.dot(xs, w1_ref[...], preferred_element_type=jnp.float32)
            h1 = jnp.maximum(h1 + b1_ref[...], 0.0).astype(jnp.bfloat16)
            # Layer 2: Linear(512 -> 512) + ReLU
            h2 = jnp.dot(h1, w2_ref[...], preferred_element_type=jnp.float32)
            h2 = jnp.maximum(h2 + b2_ref[...], 0.0).astype(jnp.bfloat16)
            # Layer 3: Linear(512 -> 10), lane-padded to 128, no activation
            logits = jnp.dot(h2, w3_ref[...], preferred_element_type=jnp.float32)
            o_ref[rows, :] = (logits + b3_ref[...]).astype(o_ref.dtype)

    return mlp_kernel


@jax.jit
def mlp_forward(x_nchw, w1, b1, w2, b2, w3, b3):
    B = x_nchw.shape[0]
    # nn.Flatten(): flatten everything after batch (row-major, same as torch).
    x = x_nchw.reshape(B, IN_FEATS)

    tile_b = _pick_tile_b(B)
    n_tiles = pl.cdiv(B, tile_b)
    b_pad = n_tiles * tile_b
    if b_pad != B:
        x = jnp.pad(x, ((0, b_pad - B), (0, 0)))
    n_sub = 2 if tile_b >= 256 else 1

    # Weight prep (tiny, ~1.5 MB total, one-time per call): bf16 MXU operands;
    # W3/b3 lane-padded 10 -> 128 so the output store is lane-dense.
    w1p = w1.astype(jnp.bfloat16)                                           # (784, 512)
    w2p = w2.astype(jnp.bfloat16)                                           # (512, 512)
    w3p = jnp.pad(w3.astype(jnp.bfloat16), ((0, 0), (0, OUT_PAD - OUT_FEATS)))
    b1p = b1.astype(jnp.float32)
    b2p = b2.astype(jnp.float32)
    b3p = jnp.pad(b3.astype(jnp.float32), ((0, 0), (0, OUT_PAD - OUT_FEATS)))

    flops = 2 * b_pad * (IN_FEATS * HIDDEN + HIDDEN * HIDDEN + HIDDEN * OUT_PAD)
    bytes_accessed = (
        x.size * x.dtype.itemsize
        + (w1p.size + w2p.size + w3p.size) * 2
        + (b1p.size + b2p.size + b3p.size) * 4
        + b_pad * OUT_PAD * 4)

    resident = lambda i: (0, 0)   # weights/biases stay VMEM-resident across steps
    out = pl.pallas_call(
        _make_kernel(tile_b, n_sub),
        out_shape=jax.ShapeDtypeStruct((b_pad, OUT_PAD), jnp.float32),
        grid=(n_tiles,),
        in_specs=[
            pl.BlockSpec((tile_b, IN_FEATS), lambda i: (i, 0)),   # x tile (f32, unpadded K)
            pl.BlockSpec((IN_FEATS, HIDDEN), resident),           # W1
            pl.BlockSpec((1, HIDDEN), resident),                  # b1
            pl.BlockSpec((HIDDEN, HIDDEN), resident),             # W2
            pl.BlockSpec((1, HIDDEN), resident),                  # b2
            pl.BlockSpec((HIDDEN, OUT_PAD), resident),            # W3 (lane-padded)
            pl.BlockSpec((1, OUT_PAD), resident),                 # b3 (lane-padded)
        ],
        out_specs=pl.BlockSpec((tile_b, OUT_PAD), lambda i: (i, 0)),
        compiler_params=pltpu.CompilerParams(
            dimension_semantics=("parallel",),
            vmem_limit_bytes=32 * 1024 * 1024),
        cost_estimate=pl.CostEstimate(
            flops=flops, transcendentals=0, bytes_accessed=bytes_accessed),
    )(x, w1p, b1p, w2p, b2p, w3p, b3p)

    # Drop batch padding and the 118 zero-padded logit lanes.
    return out[:B, :OUT_FEATS]


def init_params(key):
    # Deterministic init mimicking torch's default Linear init
    # (uniform(-1/sqrt(fan_in), 1/sqrt(fan_in))).  Weights stored [in, out],
    # biases stored (1, out) for a clean BlockSpec.
    def linear(key, fan_in, fan_out):
        kw, kb = jax.random.split(key)
        bound = 1.0 / jnp.sqrt(fan_in)
        w = jax.random.uniform(kw, (fan_in, fan_out), jnp.float32, -bound, bound)
        b = jax.random.uniform(kb, (1, fan_out), jnp.float32, -bound, bound)
        return w, b

    k1, k2, k3 = jax.random.split(key, 3)
    w1, b1 = linear(k1, IN_FEATS, HIDDEN)
    w2, b2 = linear(k2, HIDDEN, HIDDEN)
    w3, b3 = linear(k3, HIDDEN, OUT_FEATS)
    return w1, b1, w2, b2, w3, b3


def reference_forward(x_nchw, w1, b1, w2, b2, w3, b3):
    # Same numerics as the kernel: bf16 matmul inputs, f32 accumulation.
    # (The torch module is pure f32; bf16 MXU inputs deviate by ~1e-2 on logits.)
    x = x_nchw.reshape(x_nchw.shape[0], -1).astype(jnp.bfloat16)
    h1 = jnp.dot(x, w1.astype(jnp.bfloat16),
                 preferred_element_type=jnp.float32) + b1
    h1 = jnp.maximum(h1, 0.0).astype(jnp.bfloat16)
    h2 = jnp.dot(h1, w2.astype(jnp.bfloat16),
                 preferred_element_type=jnp.float32) + b2
    h2 = jnp.maximum(h2, 0.0).astype(jnp.bfloat16)
    return jnp.dot(h2, w3.astype(jnp.bfloat16),
                   preferred_element_type=jnp.float32) + b3


if __name__ == "__main__":
    key = jax.random.PRNGKey(0)
    kx, kp = jax.random.split(key)
    params = init_params(kp)

    # Tiny batch (single 8-row tile): small-batch latency path.
    x_small = jax.random.normal(kx, (4, 1, 28, 28), dtype=jnp.float32)
    out_small = jax.block_until_ready(mlp_forward(x_small, *params))
    ref_small = reference_forward(x_small, *params)
    assert out_small.shape == (4, 10)
    assert jnp.allclose(out_small, ref_small, atol=2e-2, rtol=2e-2), "small-batch mismatch"

    # Larger batch: exercises 2 grid tiles (v7x megacore path) and the
    # in-kernel 2-way M sub-tiling (tile_b = 256, sub = 128).
    x_big = jax.random.normal(kx, (512, 1, 28, 28), dtype=jnp.float32)
    out_big = jax.block_until_ready(mlp_forward(x_big, *params))
    ref_big = reference_forward(x_big, *params)
    assert out_big.shape == (512, 10)
    assert jnp.allclose(out_big, ref_big, atol=2e-2, rtol=2e-2), "multi-tile mismatch"

    print("KERNEL_OK")
</pallas_src>

<mosaic_0001>
module attributes {stable_mosaic.version = 11 : i64} {
  func.func @mlp_kernel(%arg0: i32, %arg1: memref<8x784xf32, #tpu.memory_space<vmem>>, %arg2: memref<784x512xbf16, #tpu.memory_space<vmem>>, %arg3: memref<1x512xf32, #tpu.memory_space<vmem>>, %arg4: memref<512x512xbf16, #tpu.memory_space<vmem>>, %arg5: memref<1x512xf32, #tpu.memory_space<vmem>>, %arg6: memref<512x128xbf16, #tpu.memory_space<vmem>>, %arg7: memref<1x128xf32, #tpu.memory_space<vmem>>, %arg8: memref<8x128xf32, #tpu.memory_space<vmem>>) attributes {dimension_semantics = [#tpu.dimension_semantics<parallel>], iteration_bounds = array<i64: 1>, scalar_prefetch = 0 : i64, scratch_operands = 0 : i64, tpu.core_type = #tpu.core_type<tc>, window_params = [{transform_indices = @transform_0, window_bounds = array<i64: 8, 784>}, {pipeline_mode = #tpu.pipeline_mode<synchronous>, transform_indices = @transform_1, window_bounds = array<i64: 784, 512>}, {pipeline_mode = #tpu.pipeline_mode<synchronous>, transform_indices = @transform_2, window_bounds = array<i64: 1, 512>}, {pipeline_mode = #tpu.pipeline_mode<synchronous>, transform_indices = @transform_3, window_bounds = array<i64: 512, 512>}, {pipeline_mode = #tpu.pipeline_mode<synchronous>, transform_indices = @transform_4, window_bounds = array<i64: 1, 512>}, {pipeline_mode = #tpu.pipeline_mode<synchronous>, transform_indices = @transform_5, window_bounds = array<i64: 512, 128>}, {pipeline_mode = #tpu.pipeline_mode<synchronous>, transform_indices = @transform_6, window_bounds = array<i64: 1, 128>}, {transform_indices = @transform_7, window_bounds = array<i64: 8, 128>}]} {
    %c0 = arith.constant 0 : index
    %c0_0 = arith.constant 0 : index
    %0 = vector.load %arg1[%c0, %c0_0] : memref<8x784xf32, #tpu.memory_space<vmem>>, vector<8x784xf32>
    %1 = arith.truncf %0 : vector<8x784xf32> to vector<8x784xbf16>
    %c0_1 = arith.constant 0 : index
    %c0_2 = arith.constant 0 : index
    %2 = vector.load %arg2[%c0_1, %c0_2] : memref<784x512xbf16, #tpu.memory_space<vmem>>, vector<784x512xbf16>
    %cst = arith.constant dense<0.000000e+00> : vector<8x512xf32>
    %3 = tpu.matmul %1, %2, %cst {dimension_numbers = #tpu.dot_dimension_numbers<[1], [0], [0], [1], [0, 0, 1, 1], [], []>} : vector<8x784xbf16>, vector<784x512xbf16>, vector<8x512xf32> -> vector<8x512xf32>
    %c0_3 = arith.constant 0 : index
    %c0_4 = arith.constant 0 : index
    %4 = vector.load %arg3[%c0_3, %c0_4] : memref<1x512xf32, #tpu.memory_space<vmem>>, vector<1x512xf32>
    %5 = vector.broadcast %4 : vector<1x512xf32> to vector<8x512xf32>
    %6 = arith.addf %3, %5 : vector<8x512xf32>
    %cst_5 = arith.constant 0.000000e+00 : f32
    %7 = vector.broadcast %cst_5 : f32 to vector<8x512xf32>
    %8 = arith.maximumf %6, %7 : vector<8x512xf32>
    %9 = arith.truncf %8 : vector<8x512xf32> to vector<8x512xbf16>
    %c0_6 = arith.constant 0 : index
    %c0_7 = arith.constant 0 : index
    %10 = vector.load %arg4[%c0_6, %c0_7] : memref<512x512xbf16, #tpu.memory_space<vmem>>, vector<512x512xbf16>
    %cst_8 = arith.constant dense<0.000000e+00> : vector<8x512xf32>
    %11 = tpu.matmul %9, %10, %cst_8 {dimension_numbers = #tpu.dot_dimension_numbers<[1], [0], [0], [1], [0, 0, 1, 1], [], []>} : vector<8x512xbf16>, vector<512x512xbf16>, vector<8x512xf32> -> vector<8x512xf32>
    %c0_9 = arith.constant 0 : index
    %c0_10 = arith.constant 0 : index
    %12 = vector.load %arg5[%c0_9, %c0_10] : memref<1x512xf32, #tpu.memory_space<vmem>>, vector<1x512xf32>
    %13 = vector.broadcast %12 : vector<1x512xf32> to vector<8x512xf32>
    %14 = arith.addf %11, %13 : vector<8x512xf32>
    %cst_11 = arith.constant 0.000000e+00 : f32
    %15 = vector.broadcast %cst_11 : f32 to vector<8x512xf32>
    %16 = arith.maximumf %14, %15 : vector<8x512xf32>
    %17 = arith.truncf %16 : vector<8x512xf32> to vector<8x512xbf16>
    %c0_12 = arith.constant 0 : index
    %c0_13 = arith.constant 0 : index
    %18 = vector.load %arg6[%c0_12, %c0_13] : memref<512x128xbf16, #tpu.memory_space<vmem>>, vector<512x128xbf16>
    %cst_14 = arith.constant dense<0.000000e+00> : vector<8x128xf32>
    %19 = tpu.matmul %17, %18, %cst_14 {dimension_numbers = #tpu.dot_dimension_numbers<[1], [0], [0], [1], [0, 0, 1, 1], [], []>} : vector<8x512xbf16>, vector<512x128xbf16>, vector<8x128xf32> -> vector<8x128xf32>
    %c0_15 = arith.constant 0 : index
    %c0_16 = arith.constant 0 : index
    %20 = vector.load %arg7[%c0_15, %c0_16] : memref<1x128xf32, #tpu.memory_space<vmem>>, vector<1x128xf32>
    %21 = vector.broadcast %20 : vector<1x128xf32> to vector<8x128xf32>
    %22 = arith.addf %19, %21 : vector<8x128xf32>
    %c0_17 = arith.constant 0 : index
    %c0_18 = arith.constant 0 : index
    %23 = vector.load %arg8[%c0_17, %c0_18] : memref<8x128xf32, #tpu.memory_space<vmem>>, vector<8x128xf32>
    tpu.vector_store %arg8[%c0_17, %c0_18], %22 {strides = array<i32>} : memref<8x128xf32, #tpu.memory_space<vmem>>, vector<8x128xf32>,
    return
  }
  func.func @transform_0(%arg0: i32) -> (i32, i32) {
    %c0_i32 = arith.constant 0 : i32
    %c0_i32_0 = arith.constant 0 : i32
    return %arg0, %c0_i32 : i32, i32
  }
  func.func @transform_1(%arg0: i32) -> (i32, i32) {
    %c0_i32 = arith.constant 0 : i32
    %c0_i32_0 = arith.constant 0 : i32
    %c0_i32_1 = arith.constant 0 : i32
    return %c0_i32, %c0_i32_0 : i32, i32
  }
  func.func @transform_2(%arg0: i32) -> (i32, i32) {
    %c0_i32 = arith.constant 0 : i32
    %c0_i32_0 = arith.constant 0 : i32
    %c0_i32_1 = arith.constant 0 : i32
    return %c0_i32, %c0_i32_0 : i32, i32
  }
  func.func @transform_3(%arg0: i32) -> (i32, i32) {
    %c0_i32 = arith.constant 0 : i32
    %c0_i32_0 = arith.constant 0 : i32
    %c0_i32_1 = arith.constant 0 : i32
    return %c0_i32, %c0_i32_0 : i32, i32
  }
  func.func @transform_4(%arg0: i32) -> (i32, i32) {
    %c0_i32 = arith.constant 0 : i32
    %c0_i32_0 = arith.constant 0 : i32
    %c0_i32_1 = arith.constant 0 : i32
    return %c0_i32, %c0_i32_0 : i32, i32
  }
  func.func @transform_5(%arg0: i32) -> (i32, i32) {
    %c0_i32 = arith.constant 0 : i32
    %c0_i32_0 = arith.constant 0 : i32
    %c0_i32_1 = arith.constant 0 : i32
    return %c0_i32, %c0_i32_0 : i32, i32
  }
  func.func @transform_6(%arg0: i32) -> (i32, i32) {
    %c0_i32 = arith.constant 0 : i32
    %c0_i32_0 = arith.constant 0 : i32
    %c0_i32_1 = arith.constant 0 : i32
    return %c0_i32, %c0_i32_0 : i32, i32
  }
  func.func @transform_7(%arg0: i32) -> (i32, i32) {
    %c0_i32 = arith.constant 0 : i32
    %c0_i32_0 = arith.constant 0 : i32
    return %arg0, %c0_i32 : i32, i32
  }
}

</mosaic_0001>

<llo_original>
// kernel: mlp_forward.1
$region0: #{mlp_forward.1}
  #allocation0 [shape = 'u32[]', space=smem, size = 0x4, offset = 0x4, fixed_abs, tag = 'smem constant byte address 0x4 - core index']
  #allocation1 [shape = 'u32[72,128]{1,0:T(1,128)}', space=vmem, size = 0x9000, scoped, tag = 'internal scratch']
  %s0 = inlined_call_operand.vmem [shape: f32[8,784], index: 0, kind: input, shape index: {}]
  %s1 = inlined_call_operand.vmem [shape: bf16[784,512], index: 1, kind: input, shape index: {}]
  %s2 = inlined_call_operand.vmem [shape: f32[1,512], index: 2, kind: input, shape index: {}]
  %s3 = inlined_call_operand.vmem [shape: bf16[512,512], index: 3, kind: input, shape index: {}]
  %s4 = inlined_call_operand.vmem [shape: f32[1,512], index: 4, kind: input, shape index: {}]
  %s5 = inlined_call_operand.vmem [shape: bf16[512,128], index: 5, kind: input, shape index: {}]
  %s6 = inlined_call_operand.vmem [shape: f32[1,128], index: 6, kind: input, shape index: {}]
  %s7 = inlined_call_operand.vmem [shape: f32[8,128], index: 7, kind: output, shape index: {}]
  %s8 = sld [smem:[#allocation0]]
  $region38: #{mlp_forward.1} parent=0
    _
  %s10 = ssub.s32 1, %s8
  %s11 = scalar_select 0, %s10, %s8
  // Predicated region
  $region2: #{mlp_forward.1} parent=0 // pred_check
    _
  $region3: #{mlp_forward.1} parent=0 // pred_check_branch
    %13 = sbr.rel (0) target = $region5
  $region4: #{mlp_forward.1} parent=0 // pred_region
    _
  $region5: #{mlp_forward.1} parent=0 // pred_fallthru
    _
  // Predicated region
  $region6: #{mlp_forward.1} parent=0 // pred_check
    _
  $region7: #{mlp_forward.1} parent=0 // pred_check_branch
    %15 = sbr.rel (0) target = $region9
  $region8: #{mlp_forward.1} parent=0 // pred_region
    _
  $region9: #{mlp_forward.1} parent=0 // pred_fallthru
    _
  // Predicated region
  $region10: #{mlp_forward.1} parent=0 // pred_check
    _
  $region11: #{mlp_forward.1} parent=0 // pred_check_branch
    %17 = sbr.rel (0) target = $region13
  $region12: #{mlp_forward.1} parent=0 // pred_region
    _
  $region13: #{mlp_forward.1} parent=0 // pred_fallthru
    _
  // Predicated region
  $region14: #{mlp_forward.1} parent=0 // pred_check
    _
  $region15: #{mlp_forward.1} parent=0 // pred_check_branch
    %19 = sbr.rel (0) target = $region17
  $region16: #{mlp_forward.1} parent=0 // pred_region
    _
  $region17: #{mlp_forward.1} parent=0 // pred_fallthru
    _
  // Predicated region
  $region18: #{mlp_forward.1} parent=0 // pred_check
    _
  $region19: #{mlp_forward.1} parent=0 // pred_check_branch
    %21 = sbr.rel (0) target = $region21
  $region20: #{mlp_forward.1} parent=0 // pred_region
    _
  $region21: #{mlp_forward.1} parent=0 // pred_fallthru
    _
  // Predicated region
  $region22: #{mlp_forward.1} parent=0 // pred_check
    _
  $region23: #{mlp_forward.1} parent=0 // pred_check_branch
    %23 = sbr.rel (0) target = $region25
  $region24: #{mlp_forward.1} parent=0 // pred_region
    _
  $region25: #{mlp_forward.1} parent=0 // pred_fallthru
    _
  // Predicated region
  $region26: #{mlp_forward.1} parent=0 // pred_check
    _
  $region27: #{mlp_forward.1} parent=0 // pred_check_branch
    %25 = sbr.rel (0) target = $region29
  $region28: #{mlp_forward.1} parent=0 // pred_region
    _
  $region29: #{mlp_forward.1} parent=0 // pred_fallthru
    _
  %v27 = vld [vmem:[%s0] sm:$0xff]
  %v28 = vld [vmem:[%s0 + $0x8] sm:$0xff]
  %v29 = vld [vmem:[%s0 + $0x10] sm:$0xff]
  %v30 = vld [vmem:[%s0 + $0x18] sm:$0xff]
  %v31 = vld [vmem:[%s0 + $0x20] sm:$0xff]
  %v32 = vld [vmem:[%s0 + $0x28] sm:$0xff]
  %v33 = vld [vmem:[%s0 + $0x30] sm:$0xff]
  %v34 = vpack.c.bf16 %v27, %v27
  %v35 = vpack.c.bf16 %v28, %v28
  %v36 = vpack.c.bf16 %v29, %v29
  %v37 = vpack.c.bf16 %v30, %v30
  %v38 = vpack.c.bf16 %v31, %v31
  %v39 = vpack.c.bf16 %v32, %v32
  %v40 = vpack.c.bf16 %v33, %v33
  %v41 = vld [vmem:[%s1] sm:$0xff]
  %v42 = vld [vmem:[%s1 + $0x8] sm:$0xff]
  %v43 = vld [vmem:[%s1 + $0x10] sm:$0xff]
  %v44 = vld [vmem:[%s1 + $0x18] sm:$0xff]
  %v45 = vld [vmem:[%s1 + $0x20] sm:$0xff]
  %v46 = vld [vmem:[%s1 + $0x28] sm:$0xff]
  %v47 = vld [vmem:[%s1 + $0x30] sm:$0xff]
  %v48 = vld [vmem:[%s1 + $0x38] sm:$0xff]
  %v49 = vld [vmem:[%s1 + $0x40] sm:$0xff]
  %v50 = vld [vmem:[%s1 + $0x48] sm:$0xff]
  %v51 = vld [vmem:[%s1 + $0x50] sm:$0xff]
  %v52 = vld [vmem:[%s1 + $0x58] sm:$0xff]
  %v53 = vld [vmem:[%s1 + $0x60] sm:$0xff]
  %v54 = vld [vmem:[%s1 + $0x68] sm:$0xff]
  %v55 = vld [vmem:[%s1 + $0x70] sm:$0xff]
  %v56 = vld [vmem:[%s1 + $0x78] sm:$0xff]
  %v57 = vld [vmem:[%s1 + $0x80] sm:$0xff]
  %v58 = vld [vmem:[%s1 + $0x88] sm:$0xff]
  %v59 = vld [vmem:[%s1 + $0x90] sm:$0xff]
  %v60 = vld [vmem:[%s1 + $0x98] sm:$0xff]
  %v61 = vld [vmem:[%s1 + $0xa0] sm:$0xff]
  %v62 = vld [vmem:[%s1 + $0xa8] sm:$0xff]
  %v63 = vld [vmem:[%s1 + $0xb0] sm:$0xff]
  %v64 = vld [vmem:[%s1 + $0xb8] sm:$0xff]
  %v65 = vld [vmem:[%s1 + $0xc0] sm:$0xff]
  %v66 = vld [vmem:[%s1 + $0xc8] sm:$0xff]
  %v67 = vld [vmem:[%s1 + $0xd0] sm:$0xff]
  %v68 = vld [vmem:[%s1 + $0xd8] sm:$0xff]
  %v69 = vld [vmem:[%s1 + $0xe0] sm:$0xff]
  %v70 = vld [vmem:[%s1 + $0xe8] sm:$0xff]
  %v71 = vld [vmem:[%s1 + $0xf0] sm:$0xff]
  %v72 = vld [vmem:[%s1 + $0xf8] sm:$0xff]
  %v73 = vld [vmem:[%s1 + $0x100] sm:$0xff]
  %v74 = vld [vmem:[%s1 + $0x108] sm:$0xff]
  %v75 = vld [vmem:[%s1 + $0x110] sm:$0xff]
  %v76 = vld [vmem:[%s1 + $0x118] sm:$0xff]
  %v77 = vld [vmem:[%s1 + $0x120] sm:$0xff]
  %v78 = vld [vmem:[%s1 + $0x128] sm:$0xff]
  %v79 = vld [vmem:[%s1 + $0x130] sm:$0xff]
  %v80 = vld [vmem:[%s1 + $0x138] sm:$0xff]
  %v81 = vld [vmem:[%s1 + $0x140] sm:$0xff]
  %v82 = vld [vmem:[%s1 + $0x148] sm:$0xff]
  %v83 = vld [vmem:[%s1 + $0x150] sm:$0xff]
  %v84 = vld [vmem:[%s1 + $0x158] sm:$0xff]
  %v85 = vld [vmem:[%s1 + $0x160] sm:$0xff]
  %v86 = vld [vmem:[%s1 + $0x168] sm:$0xff]
  %v87 = vld [vmem:[%s1 + $0x170] sm:$0xff]
  %v88 = vld [vmem:[%s1 + $0x178] sm:$0xff]
  %v89 = vld [vmem:[%s1 + $0x180] sm:$0xff]
  %v90 = vld [vmem:[%s1 + $0x188] sm:$0xff]
  %v91 = vld [vmem:[%s1 + $0x190] sm:$0xff]
  %v92 = vld [vmem:[%s1 + $0x198] sm:$0xff]
  %v93 = vld [vmem:[%s1 + $0x1a0] sm:$0xff]
  %v94 = vld [vmem:[%s1 + $0x1a8] sm:$0xff]
  %v95 = vld [vmem:[%s1 + $0x1b0] sm:$0xff]
  %v96 = vld [vmem:[%s1 + $0x1b8] sm:$0xff]
  %v97 = vld [vmem:[%s1 + $0x1c0] sm:$0xff]
  %v98 = vld [vmem:[%s1 + $0x1c8] sm:$0xff]
  %v99 = vld [vmem:[%s1 + $0x1d0] sm:$0xff]
  %v100 = vld [vmem:[%s1 + $0x1d8] sm:$0xff]
  %v101 = vld [vmem:[%s1 + $0x1e0] sm:$0xff]
  %v102 = vld [vmem:[%s1 + $0x1e8] sm:$0xff]
  %v103 = vld [vmem:[%s1 + $0x1f0] sm:$0xff]
  %v104 = vld [vmem:[%s1 + $0x1f8] sm:$0xff]
  %v105 = vld [vmem:[%s1 + $0x200] sm:$0xff]
  %v106 = vld [vmem:[%s1 + $0x208] sm:$0xff]
  %v107 = vld [vmem:[%s1 + $0x210] sm:$0xff]
  %v108 = vld [vmem:[%s1 + $0x218] sm:$0xff]
  %v109 = vld [vmem:[%s1 + $0x220] sm:$0xff]
  %v110 = vld [vmem:[%s1 + $0x228] sm:$0xff]
  %v111 = vld [vmem:[%s1 + $0x230] sm:$0xff]
  %v112 = vld [vmem:[%s1 + $0x238] sm:$0xff]
  %v113 = vld [vmem:[%s1 + $0x240] sm:$0xff]
  %v114 = vld [vmem:[%s1 + $0x248] sm:$0xff]
  %v115 = vld [vmem:[%s1 + $0x250] sm:$0xff]
  %v116 = vld [vmem:[%s1 + $0x258] sm:$0xff]
  %v117 = vld [vmem:[%s1 + $0x260] sm:$0xff]
  %v118 = vld [vmem:[%s1 + $0x268] sm:$0xff]
  %v119 = vld [vmem:[%s1 + $0x270] sm:$0xff]
  %v120 = vld [vmem:[%s1 + $0x278] sm:$0xff]
  %v121 = vld [vmem:[%s1 + $0x280] sm:$0xff]
  %v122 = vld [vmem:[%s1 + $0x288] sm:$0xff]
  %v123 = vld [vmem:[%s1 + $0x290] sm:$0xff]
  %v124 = vld [vmem:[%s1 + $0x298] sm:$0xff]
  %v125 = vld [vmem:[%s1 + $0x2a0] sm:$0xff]
  %v126 = vld [vmem:[%s1 + $0x2a8] sm:$0xff]
  %v127 = vld [vmem:[%s1 + $0x2b0] sm:$0xff]
  %v128 = vld [vmem:[%s1 + $0x2b8] sm:$0xff]
  %v129 = vld [vmem:[%s1 + $0x2c0] sm:$0xff]
  %v130 = vld [vmem:[%s1 + $0x2c8] sm:$0xff]
  %v131 = vld [vmem:[%s1 + $0x2d0] sm:$0xff]
  %v132 = vld [vmem:[%s1 + $0x2d8] sm:$0xff]
  %v133 = vld [vmem:[%s1 + $0x2e0] sm:$0xff]
  %v134 = vld [vmem:[%s1 + $0x2e8] sm:$0xff]
  %v135 = vld [vmem:[%s1 + $0x2f0] sm:$0xff]
  %v136 = vld [vmem:[%s1 + $0x2f8] sm:$0xff]
  %v137 = vld [vmem:[%s1 + $0x300] sm:$0xff]
  %v138 = vld [vmem:[%s1 + $0x308] sm:$0xff]
  %v139 = vld [vmem:[%s1 + $0x310] sm:$0xff]
  %v140 = vld [vmem:[%s1 + $0x318] sm:$0xff]
  %v141 = vld [vmem:[%s1 + $0x320] sm:$0xff]
  %v142 = vld [vmem:[%s1 + $0x328] sm:$0xff]
  %v143 = vld [vmem:[%s1 + $0x330] sm:$0xff]
  %v144 = vld [vmem:[%s1 + $0x338] sm:$0xff]
  %v145 = vld [vmem:[%s1 + $0x340] sm:$0xff]
  %v146 = vld [vmem:[%s1 + $0x348] sm:$0xff]
  %v147 = vld [vmem:[%s1 + $0x350] sm:$0xff]
  %v148 = vld [vmem:[%s1 + $0x358] sm:$0xff]
  %v149 = vld [vmem:[%s1 + $0x360] sm:$0xff]
  %v150 = vld [vmem:[%s1 + $0x368] sm:$0xff]
  %v151 = vld [vmem:[%s1 + $0x370] sm:$0xff]
  %v152 = vld [vmem:[%s1 + $0x378] sm:$0xff]
  %v153 = vld [vmem:[%s1 + $0x380] sm:$0xff]
  %v154 = vld [vmem:[%s1 + $0x388] sm:$0xff]
  %v155 = vld [vmem:[%s1 + $0x390] sm:$0xff]
  %v156 = vld [vmem:[%s1 + $0x398] sm:$0xff]
  %v157 = vld [vmem:[%s1 + $0x3a0] sm:$0xff]
  %v158 = vld [vmem:[%s1 + $0x3a8] sm:$0xff]
  %v159 = vld [vmem:[%s1 + $0x3b0] sm:$0xff]
  %v160 = vld [vmem:[%s1 + $0x3b8] sm:$0xff]
  %v161 = vld [vmem:[%s1 + $0x3c0] sm:$0xff]
  %v162 = vld [vmem:[%s1 + $0x3c8] sm:$0xff]
  %v163 = vld [vmem:[%s1 + $0x3d0] sm:$0xff]
  %v164 = vld [vmem:[%s1 + $0x3d8] sm:$0xff]
  %v165 = vld [vmem:[%s1 + $0x3e0] sm:$0xff]
  %v166 = vld [vmem:[%s1 + $0x3e8] sm:$0xff]
  %v167 = vld [vmem:[%s1 + $0x3f0] sm:$0xff]
  %v168 = vld [vmem:[%s1 + $0x3f8] sm:$0xff]
  %v169 = vld [vmem:[%s1 + $0x400] sm:$0xff]
  %v170 = vld [vmem:[%s1 + $0x408] sm:$0xff]
  %v171 = vld [vmem:[%s1 + $0x410] sm:$0xff]
  %v172 = vld [vmem:[%s1 + $0x418] sm:$0xff]
  %v173 = vld [vmem:[%s1 + $0x420] sm:$0xff]
  %v174 = vld [vmem:[%s1 + $0x428] sm:$0xff]
  %v175 = vld [vmem:[%s1 + $0x430] sm:$0xff]
  %v176 = vld [vmem:[%s1 + $0x438] sm:$0xff]
  %v177 = vld [vmem:[%s1 + $0x440] sm:$0xff]
  %v178 = vld [vmem:[%s1 + $0x448] sm:$0xff]
  %v179 = vld [vmem:[%s1 + $0x450] sm:$0xff]
  %v180 = vld [vmem:[%s1 + $0x458] sm:$0xff]
  %v181 = vld [vmem:[%s1 + $0x460] sm:$0xff]
  %v182 = vld [vmem:[%s1 + $0x468] sm:$0xff]
  %v183 = vld [vmem:[%s1 + $0x470] sm:$0xff]
  %v184 = vld [vmem:[%s1 + $0x478] sm:$0xff]
  %v185 = vld [vmem:[%s1 + $0x480] sm:$0xff]
  %v186 = vld [vmem:[%s1 + $0x488] sm:$0xff]
  %v187 = vld [vmem:[%s1 + $0x490] sm:$0xff]
  %v188 = vld [vmem:[%s1 + $0x498] sm:$0xff]
  %v189 = vld [vmem:[%s1 + $0x4a0] sm:$0xff]
  %v190 = vld [vmem:[%s1 + $0x4a8] sm:$0xff]
  %v191 = vld [vmem:[%s1 + $0x4b0] sm:$0xff]
  %v192 = vld [vmem:[%s1 + $0x4b8] sm:$0xff]
  %v193 = vld [vmem:[%s1 + $0x4c0] sm:$0xff]
  %v194 = vld [vmem:[%s1 + $0x4c8] sm:$0xff]
  %v195 = vld [vmem:[%s1 + $0x4d0] sm:$0xff]
  %v196 = vld [vmem:[%s1 + $0x4d8] sm:$0xff]
  %v197 = vld [vmem:[%s1 + $0x4e0] sm:$0xff]
  %v198 = vld [vmem:[%s1 + $0x4e8] sm:$0xff]
  %v199 = vld [vmem:[%s1 + $0x4f0] sm:$0xff]
  %v200 = vld [vmem:[%s1 + $0x4f8] sm:$0xff]
  %v201 = vld [vmem:[%s1 + $0x500] sm:$0xff]
  %v202 = vld [vmem:[%s1 + $0x508] sm:$0xff]
  %v203 = vld [vmem:[%s1 + $0x510] sm:$0xff]
  %v204 = vld [vmem:[%s1 + $0x518] sm:$0xff]
  %v205 = vld [vmem:[%s1 + $0x520] sm:$0xff]
  %v206 = vld [vmem:[%s1 + $0x528] sm:$0xff]
  %v207 = vld [vmem:[%s1 + $0x530] sm:$0xff]
  %v208 = vld [vmem:[%s1 + $0x538] sm:$0xff]
  %v209 = vld [vmem:[%s1 + $0x540] sm:$0xff]
  %v210 = vld [vmem:[%s1 + $0x548] sm:$0xff]
  %v211 = vld [vmem:[%s1 + $0x550] sm:$0xff]
  %v212 = vld [vmem:[%s1 + $0x558] sm:$0xff]
  %v213 = vld [vmem:[%s1 + $0x560] sm:$0xff]
  %v214 = vld [vmem:[%s1 + $0x568] sm:$0xff]
  %v215 = vld [vmem:[%s1 + $0x570] sm:$0xff]
  %v216 = vld [vmem:[%s1 + $0x578] sm:$0xff]
  %v217 = vld [vmem:[%s1 + $0x580] sm:$0xff]
  %v218 = vld [vmem:[%s1 + $0x588] sm:$0xff]
  %v219 = vld [vmem:[%s1 + $0x590] sm:$0xff]
  %v220 = vld [vmem:[%s1 + $0x598] sm:$0xff]
  %v221 = vld [vmem:[%s1 + $0x5a0] sm:$0xff]
  %v222 = vld [vmem:[%s1 + $0x5a8] sm:$0xff]
  %v223 = vld [vmem:[%s1 + $0x5b0] sm:$0xff]
  %v224 = vld [vmem:[%s1 + $0x5b8] sm:$0xff]
  %v225 = vld [vmem:[%s1 + $0x5c0] sm:$0xff]
  %v226 = vld [vmem:[%s1 + $0x5c8] sm:$0xff]
  %v227 = vld [vmem:[%s1 + $0x5d0] sm:$0xff]
  %v228 = vld [vmem:[%s1 + $0x5d8] sm:$0xff]
  %v229 = vld [vmem:[%s1 + $0x5e0] sm:$0xff]
  %v230 = vld [vmem:[%s1 + $0x5e8] sm:$0xff]
  %v231 = vld [vmem:[%s1 + $0x5f0] sm:$0xff]
  %v232 = vld [vmem:[%s1 + $0x5f8] sm:$0xff]
  %v233 = vld [vmem:[%s1 + $0x600] sm:$0xff]
  %v234 = vld [vmem:[%s1 + $0x608] sm:$0xff]
  %v235 = vld [vmem:[%s1 + $0x610] sm:$0xff]
  %v236 = vld [vmem:[%s1 + $0x618] sm:$0xff]
  %v237 = vld [vmem:[%s2] sm:$0xf]
  %v239 = vperm.slane %v237, 0
  %v240 = vperm.slane %v237, 1
  %v241 = vperm.slane %v237, 2
  %v242 = vperm.slane %v237, 3
  %v443 = vunpack.c.l.b16 %v41
  %v444 = vunpack.c.h.b16 %v41
  %v445 = vunpack.c.l.b16 %v42
  %v446 = vunpack.c.h.b16 %v42
  %v447 = vunpack.c.l.b16 %v43
  %v448 = vunpack.c.h.b16 %v43
  %v449 = vunpack.c.l.b16 %v44
  %v450 = vunpack.c.h.b16 %v44
  %v451 = vunpack.c.l.b16 %v45
  %v452 = vunpack.c.h.b16 %v45
  %v453 = vunpack.c.l.b16 %v46
  %v454 = vunpack.c.h.b16 %v46
  %v455 = vunpack.c.l.b16 %v47
  %v456 = vunpack.c.h.b16 %v47
  %v457 = vunpack.c.l.b16 %v48
  %v458 = vunpack.c.h.b16 %v48
  %v459 = vunpack.c.l.b16 %v49
  %v460 = vunpack.c.h.b16 %v49
  %v461 = vunpack.c.l.b16 %v50
  %v462 = vunpack.c.h.b16 %v50
  %v463 = vunpack.c.l.b16 %v51
  %v464 = vunpack.c.h.b16 %v51
  %v465 = vunpack.c.l.b16 %v52
  %v466 = vunpack.c.h.b16 %v52
  %v467 = vunpack.c.l.b16 %v53
  %v468 = vunpack.c.h.b16 %v53
  %v469 = vunpack.c.l.b16 %v54
  %v470 = vunpack.c.h.b16 %v54
  %v471 = vunpack.c.l.b16 %v55
  %v472 = vunpack.c.h.b16 %v55
  %v473 = vunpack.c.l.b16 %v56
  %v474 = vunpack.c.h.b16 %v56
  %v475 = vunpack.c.l.b16 %v57
  %v476 = vunpack.c.h.b16 %v57
  %v477 = vunpack.c.l.b16 %v58
  %v478 = vunpack.c.h.b16 %v58
  %v479 = vunpack.c.l.b16 %v59
  %v480 = vunpack.c.h.b16 %v59
  %v481 = vunpack.c.l.b16 %v60
  %v482 = vunpack.c.h.b16 %v60
  %v483 = vunpack.c.l.b16 %v61
  %v484 = vunpack.c.h.b16 %v61
  %v485 = vunpack.c.l.b16 %v62
  %v486 = vunpack.c.h.b16 %v62
  %v487 = vunpack.c.l.b16 %v63
  %v488 = vunpack.c.h.b16 %v63
  %v489 = vunpack.c.l.b16 %v64
  %v490 = vunpack.c.h.b16 %v64
  %v491 = vunpack.c.l.b16 %v65
  %v492 = vunpack.c.h.b16 %v65
  %v493 = vunpack.c.l.b16 %v66
  %v494 = vunpack.c.h.b16 %v66
  %v495 = vunpack.c.l.b16 %v67
  %v496 = vunpack.c.h.b16 %v67
  %v497 = vunpack.c.l.b16 %v68
  %v498 = vunpack.c.h.b16 %v68
  %v499 = vunpack.c.l.b16 %v69
  %v500 = vunpack.c.h.b16 %v69
  %v501 = vunpack.c.l.b16 %v70
  %v502 = vunpack.c.h.b16 %v70
  %v503 = vunpack.c.l.b16 %v71
  %v504 = vunpack.c.h.b16 %v71
  %v505 = vunpack.c.l.b16 %v72
  %v506 = vunpack.c.h.b16 %v72
  %v507 = vunpack.c.l.b16 %v73
  %v508 = vunpack.c.h.b16 %v73
  %v509 = vunpack.c.l.b16 %v74
  %v510 = vunpack.c.h.b16 %v74
  %v511 = vunpack.c.l.b16 %v75
  %v512 = vunpack.c.h.b16 %v75
  %v513 = vunpack.c.l.b16 %v76
  %v514 = vunpack.c.h.b16 %v76
  %v515 = vunpack.c.l.b16 %v77
  %v516 = vunpack.c.h.b16 %v77
  %v517 = vunpack.c.l.b16 %v78
  %v518 = vunpack.c.h.b16 %v78
  %v519 = vunpack.c.l.b16 %v79
  %v520 = vunpack.c.h.b16 %v79
  %v521 = vunpack.c.l.b16 %v80
  %v522 = vunpack.c.h.b16 %v80
  %v523 = vunpack.c.l.b16 %v81
  %v524 = vunpack.c.h.b16 %v81
  %v525 = vunpack.c.l.b16 %v82
  %v526 = vunpack.c.h.b16 %v82
  %v527 = vunpack.c.l.b16 %v83
  %v528 = vunpack.c.h.b16 %v83
  %v529 = vunpack.c.l.b16 %v84
  %v530 = vunpack.c.h.b16 %v84
  %v531 = vunpack.c.l.b16 %v85
  %v532 = vunpack.c.h.b16 %v85
  %v533 = vunpack.c.l.b16 %v86
  %v534 = vunpack.c.h.b16 %v86
  %v535 = vunpack.c.l.b16 %v87
  %v536 = vunpack.c.h.b16 %v87
  %v537 = vunpack.c.l.b16 %v88
  %v538 = vunpack.c.h.b16 %v88
  %v539 = vunpack.c.l.b16 %v89
  %v540 = vunpack.c.h.b16 %v89
  %v541 = vunpack.c.l.b16 %v90
  %v542 = vunpack.c.h.b16 %v90
  %v543 = vunpack.c.l.b16 %v91
  %v544 = vunpack.c.h.b16 %v91
  %v545 = vunpack.c.l.b16 %v92
  %v546 = vunpack.c.h.b16 %v92
  %v547 = vunpack.c.l.b16 %v93
  %v548 = vunpack.c.h.b16 %v93
  %v549 = vunpack.c.l.b16 %v94
  %v550 = vunpack.c.h.b16 %v94
  %v551 = vunpack.c.l.b16 %v95
  %v552 = vunpack.c.h.b16 %v95
  %v553 = vunpack.c.l.b16 %v96
  %v554 = vunpack.c.h.b16 %v96
  %v555 = vunpack.c.l.b16 %v97
  %v556 = vunpack.c.h.b16 %v97
  %v557 = vunpack.c.l.b16 %v98
  %v558 = vunpack.c.h.b16 %v98
  %v559 = vunpack.c.l.b16 %v99
  %v560 = vunpack.c.h.b16 %v99
  %v561 = vunpack.c.l.b16 %v100
  %v562 = vunpack.c.h.b16 %v100
  %v563 = vunpack.c.l.b16 %v101
  %v564 = vunpack.c.h.b16 %v101
  %v565 = vunpack.c.l.b16 %v102
  %v566 = vunpack.c.h.b16 %v102
  %v567 = vunpack.c.l.b16 %v103
  %v568 = vunpack.c.h.b16 %v103
  %v569 = vunpack.c.l.b16 %v104
  %v570 = vunpack.c.h.b16 %v104
  %v571 = vunpack.c.l.b16 %v105
  %v572 = vunpack.c.h.b16 %v105
  %v573 = vunpack.c.l.b16 %v106
  %v574 = vunpack.c.h.b16 %v106
  %v575 = vunpack.c.l.b16 %v107
  %v576 = vunpack.c.h.b16 %v107
  %v577 = vunpack.c.l.b16 %v108
  %v578 = vunpack.c.h.b16 %v108
  %v579 = vunpack.c.l.b16 %v109
  %v580 = vunpack.c.h.b16 %v109
  %v581 = vunpack.c.l.b16 %v110
  %v582 = vunpack.c.h.b16 %v110
  %v583 = vunpack.c.l.b16 %v111
  %v584 = vunpack.c.h.b16 %v111
  %v585 = vunpack.c.l.b16 %v112
  %v586 = vunpack.c.h.b16 %v112
  %v587 = vunpack.c.l.b16 %v113
  %v588 = vunpack.c.h.b16 %v113
  %v589 = vunpack.c.l.b16 %v114
  %v590 = vunpack.c.h.b16 %v114
  %v591 = vunpack.c.l.b16 %v115
  %v592 = vunpack.c.h.b16 %v115
  %v593 = vunpack.c.l.b16 %v116
  %v594 = vunpack.c.h.b16 %v116
  %v595 = vunpack.c.l.b16 %v117
  %v596 = vunpack.c.h.b16 %v117
  %v597 = vunpack.c.l.b16 %v118
  %v598 = vunpack.c.h.b16 %v118
  %v599 = vunpack.c.l.b16 %v119
  %v600 = vunpack.c.h.b16 %v119
  %v601 = vunpack.c.l.b16 %v120
  %v602 = vunpack.c.h.b16 %v120
  %v603 = vunpack.c.l.b16 %v121
  %v604 = vunpack.c.h.b16 %v121
  %v605 = vunpack.c.l.b16 %v122
  %v606 = vunpack.c.h.b16 %v122
  %v607 = vunpack.c.l.b16 %v123
  %v608 = vunpack.c.h.b16 %v123
  %v609 = vunpack.c.l.b16 %v124
  %v610 = vunpack.c.h.b16 %v124
  %v611 = vunpack.c.l.b16 %v125
  %v612 = vunpack.c.h.b16 %v125
  %v613 = vunpack.c.l.b16 %v126
  %v614 = vunpack.c.h.b16 %v126
  %v615 = vunpack.c.l.b16 %v127
  %v616 = vunpack.c.h.b16 %v127
  %v617 = vunpack.c.l.b16 %v128
  %v618 = vunpack.c.h.b16 %v128
  %v619 = vunpack.c.l.b16 %v129
  %v620 = vunpack.c.h.b16 %v129
  %v621 = vunpack.c.l.b16 %v130
  %v622 = vunpack.c.h.b16 %v130
  %v623 = vunpack.c.l.b16 %v131
  %v624 = vunpack.c.h.b16 %v131
  %v625 = vunpack.c.l.b16 %v132
  %v626 = vunpack.c.h.b16 %v132
  %v627 = vunpack.c.l.b16 %v133
  %v628 = vunpack.c.h.b16 %v133
  %v629 = vunpack.c.l.b16 %v134
  %v630 = vunpack.c.h.b16 %v134
  %v631 = vunpack.c.l.b16 %v135
  %v632 = vunpack.c.h.b16 %v135
  %v633 = vunpack.c.l.b16 %v136
  %v634 = vunpack.c.h.b16 %v136
  %v635 = vunpack.c.l.b16 %v137
  %v636 = vunpack.c.h.b16 %v137
  %v637 = vunpack.c.l.b16 %v138
  %v638 = vunpack.c.h.b16 %v138
  %v639 = vunpack.c.l.b16 %v139
  %v640 = vunpack.c.h.b16 %v139
  %v641 = vunpack.c.l.b16 %v140
  %v642 = vunpack.c.h.b16 %v140
  %v643 = vunpack.c.l.b16 %v141
  %v644 = vunpack.c.h.b16 %v141
  %v645 = vunpack.c.l.b16 %v142
  %v646 = vunpack.c.h.b16 %v142
  %v647 = vunpack.c.l.b16 %v143
  %v648 = vunpack.c.h.b16 %v143
  %v649 = vunpack.c.l.b16 %v144
  %v650 = vunpack.c.h.b16 %v144
  %v651 = vunpack.c.l.b16 %v145
  %v652 = vunpack.c.h.b16 %v145
  %v653 = vunpack.c.l.b16 %v146
  %v654 = vunpack.c.h.b16 %v146
  %v655 = vunpack.c.l.b16 %v147
  %v656 = vunpack.c.h.b16 %v147
  %v657 = vunpack.c.l.b16 %v148
  %v658 = vunpack.c.h.b16 %v148
  %v659 = vunpack.c.l.b16 %v149
  %v660 = vunpack.c.h.b16 %v149
  %v661 = vunpack.c.l.b16 %v150
  %v662 = vunpack.c.h.b16 %v150
  %v663 = vunpack.c.l.b16 %v151
  %v664 = vunpack.c.h.b16 %v151
  %v665 = vunpack.c.l.b16 %v152
  %v666 = vunpack.c.h.b16 %v152
  %v667 = vunpack.c.l.b16 %v153
  %v668 = vunpack.c.h.b16 %v153
  %v669 = vunpack.c.l.b16 %v154
  %v670 = vunpack.c.h.b16 %v154
  %v671 = vunpack.c.l.b16 %v155
  %v672 = vunpack.c.h.b16 %v155
  %v673 = vunpack.c.l.b16 %v156
  %v674 = vunpack.c.h.b16 %v156
  %v675 = vunpack.c.l.b16 %v157
  %v676 = vunpack.c.h.b16 %v157
  %v677 = vunpack.c.l.b16 %v158
  %v678 = vunpack.c.h.b16 %v158
  %v679 = vunpack.c.l.b16 %v159
  %v680 = vunpack.c.h.b16 %v159
  %v681 = vunpack.c.l.b16 %v160
  %v682 = vunpack.c.h.b16 %v160
  %v683 = vunpack.c.l.b16 %v161
  %v684 = vunpack.c.h.b16 %v161
  %v685 = vunpack.c.l.b16 %v162
  %v686 = vunpack.c.h.b16 %v162
  %v687 = vunpack.c.l.b16 %v163
  %v688 = vunpack.c.h.b16 %v163
  %v689 = vunpack.c.l.b16 %v164
  %v690 = vunpack.c.h.b16 %v164
  %v691 = vunpack.c.l.b16 %v165
  %v692 = vunpack.c.h.b16 %v165
  %v693 = vunpack.c.l.b16 %v166
  %v694 = vunpack.c.h.b16 %v166
  %v695 = vunpack.c.l.b16 %v167
  %v696 = vunpack.c.h.b16 %v167
  %v697 = vunpack.c.l.b16 %v168
  %v698 = vunpack.c.h.b16 %v168
  %v699 = vunpack.c.l.b16 %v169
  %v700 = vunpack.c.h.b16 %v169
  %v701 = vunpack.c.l.b16 %v170
  %v702 = vunpack.c.h.b16 %v170
  %v703 = vunpack.c.l.b16 %v171
  %v704 = vunpack.c.h.b16 %v171
  %v705 = vunpack.c.l.b16 %v172
  %v706 = vunpack.c.h.b16 %v172
  %v707 = vunpack.c.l.b16 %v173
  %v708 = vunpack.c.h.b16 %v173
  %v709 = vunpack.c.l.b16 %v174
  %v710 = vunpack.c.h.b16 %v174
  %v711 = vunpack.c.l.b16 %v175
  %v712 = vunpack.c.h.b16 %v175
  %v713 = vunpack.c.l.b16 %v176
  %v714 = vunpack.c.h.b16 %v176
  %v715 = vunpack.c.l.b16 %v177
  %v716 = vunpack.c.h.b16 %v177
  %v717 = vunpack.c.l.b16 %v178
  %v718 = vunpack.c.h.b16 %v178
  %v719 = vunpack.c.l.b16 %v179
  %v720 = vunpack.c.h.b16 %v179
  %v721 = vunpack.c.l.b16 %v180
  %v722 = vunpack.c.h.b16 %v180
  %v723 = vunpack.c.l.b16 %v181
  %v724 = vunpack.c.h.b16 %v181
  %v725 = vunpack.c.l.b16 %v182
  %v726 = vunpack.c.h.b16 %v182
  %v727 = vunpack.c.l.b16 %v183
  %v728 = vunpack.c.h.b16 %v183
  %v729 = vunpack.c.l.b16 %v184
  %v730 = vunpack.c.h.b16 %v184
  %v731 = vunpack.c.l.b16 %v185
  %v732 = vunpack.c.h.b16 %v185
  %v733 = vunpack.c.l.b16 %v186
  %v734 = vunpack.c.h.b16 %v186
  %v735 = vunpack.c.l.b16 %v187
  %v736 = vunpack.c.h.b16 %v187
  %v737 = vunpack.c.l.b16 %v188
  %v738 = vunpack.c.h.b16 %v188
  %v739 = vunpack.c.l.b16 %v189
  %v740 = vunpack.c.h.b16 %v189
  %v741 = vunpack.c.l.b16 %v190
  %v742 = vunpack.c.h.b16 %v190
  %v743 = vunpack.c.l.b16 %v191
  %v744 = vunpack.c.h.b16 %v191
  %v745 = vunpack.c.l.b16 %v192
  %v746 = vunpack.c.h.b16 %v192
  %v747 = vunpack.c.l.b16 %v193
  %v748 = vunpack.c.h.b16 %v193
  %v749 = vunpack.c.l.b16 %v194
  %v750 = vunpack.c.h.b16 %v194
  %v751 = vunpack.c.l.b16 %v195
  %v752 = vunpack.c.h.b16 %v195
  %v753 = vunpack.c.l.b16 %v196
  %v754 = vunpack.c.h.b16 %v196
  %v755 = vunpack.c.l.b16 %v197
  %v756 = vunpack.c.h.b16 %v197
  %v757 = vunpack.c.l.b16 %v198
  %v758 = vunpack.c.h.b16 %v198
  %v759 = vunpack.c.l.b16 %v199
  %v760 = vunpack.c.h.b16 %v199
  %v761 = vunpack.c.l.b16 %v200
  %v762 = vunpack.c.h.b16 %v200
  %v763 = vunpack.c.l.b16 %v201
  %v764 = vunpack.c.h.b16 %v201
  %v765 = vunpack.c.l.b16 %v202
  %v766 = vunpack.c.h.b16 %v202
  %v767 = vunpack.c.l.b16 %v203
  %v768 = vunpack.c.h.b16 %v203
  %v769 = vunpack.c.l.b16 %v204
  %v770 = vunpack.c.h.b16 %v204
  %v771 = vunpack.c.l.b16 %v205
  %v772 = vunpack.c.h.b16 %v205
  %v773 = vunpack.c.l.b16 %v206
  %v774 = vunpack.c.h.b16 %v206
  %v775 = vunpack.c.l.b16 %v207
  %v776 = vunpack.c.h.b16 %v207
  %v777 = vunpack.c.l.b16 %v208
  %v778 = vunpack.c.h.b16 %v208
  %v779 = vunpack.c.l.b16 %v209
  %v780 = vunpack.c.h.b16 %v209
  %v781 = vunpack.c.l.b16 %v210
  %v782 = vunpack.c.h.b16 %v210
  %v783 = vunpack.c.l.b16 %v211
  %v784 = vunpack.c.h.b16 %v211
  %v785 = vunpack.c.l.b16 %v212
  %v786 = vunpack.c.h.b16 %v212
  %v787 = vunpack.c.l.b16 %v213
  %v788 = vunpack.c.h.b16 %v213
  %v789 = vunpack.c.l.b16 %v214
  %v790 = vunpack.c.h.b16 %v214
  %v791 = vunpack.c.l.b16 %v215
  %v792 = vunpack.c.h.b16 %v215
  %v793 = vunpack.c.l.b16 %v216
  %v794 = vunpack.c.h.b16 %v216
  %v795 = vunpack.c.l.b16 %v217
  %v796 = vunpack.c.h.b16 %v217
  %v797 = vunpack.c.l.b16 %v218
  %v798 = vunpack.c.h.b16 %v218
  %v799 = vunpack.c.l.b16 %v219
  %v800 = vunpack.c.h.b16 %v219
  %v801 = vunpack.c.l.b16 %v220
  %v802 = vunpack.c.h.b16 %v220
  %v803 = vunpack.c.l.b16 %v221
  %v804 = vunpack.c.h.b16 %v221
  %v805 = vunpack.c.l.b16 %v222
  %v806 = vunpack.c.h.b16 %v222
  %v807 = vunpack.c.l.b16 %v223
  %v808 = vunpack.c.h.b16 %v223
  %v809 = vunpack.c.l.b16 %v224
  %v810 = vunpack.c.h.b16 %v224
  %v811 = vunpack.c.l.b16 %v225
  %v812 = vunpack.c.h.b16 %v225
  %v813 = vunpack.c.l.b16 %v226
  %v814 = vunpack.c.h.b16 %v226
  %v815 = vunpack.c.l.b16 %v227
  %v816 = vunpack.c.h.b16 %v227
  %v817 = vunpack.c.l.b16 %v228
  %v818 = vunpack.c.h.b16 %v228
  %v819 = vunpack.c.l.b16 %v229
  %v820 = vunpack.c.h.b16 %v229
  %v821 = vunpack.c.l.b16 %v230
  %v822 = vunpack.c.h.b16 %v230
  %v823 = vunpack.c.l.b16 %v231
  %v824 = vunpack.c.h.b16 %v231
  %v825 = vunpack.c.l.b16 %v232
  %v826 = vunpack.c.h.b16 %v232
  %v827 = vunpack.c.l.b16 %v233
  %v828 = vunpack.c.h.b16 %v233
  %v829 = vunpack.c.l.b16 %v234
  %v830 = vunpack.c.h.b16 %v234
  %v831 = vunpack.c.l.b16 %v235
  %v832 = vunpack.c.h.b16 %v235
  %v833 = vunpack.c.l.b16 %v236
  %v834 = vunpack.c.h.b16 %v236
  %v835 = vpack.c.b16 %v447, %v443
  %v836 = vpack.c.b16 %v448, %v444
  %v837 = vpack.c.b16 %v449, %v445
  %v838 = vpack.c.b16 %v450, %v446
  %v839 = vpack.c.b16 %v455, %v451
  %v840 = vpack.c.b16 %v456, %v452
  %v841 = vpack.c.b16 %v457, %v453
  %v842 = vpack.c.b16 %v458, %v454
  %v843 = vpack.c.b16 %v463, %v459
  %v844 = vpack.c.b16 %v464, %v460
  %v845 = vpack.c.b16 %v465, %v461
  %v846 = vpack.c.b16 %v466, %v462
  %v847 = vpack.c.b16 %v471, %v467
  %v848 = vpack.c.b16 %v472, %v468
  %v849 = vpack.c.b16 %v473, %v469
  %v850 = vpack.c.b16 %v474, %v470
  %v851 = vpack.c.b16 %v479, %v475
  %v852 = vpack.c.b16 %v480, %v476
  %v853 = vpack.c.b16 %v481, %v477
  %v854 = vpack.c.b16 %v482, %v478
  %v855 = vpack.c.b16 %v487, %v483
  %v856 = vpack.c.b16 %v488, %v484
  %v857 = vpack.c.b16 %v489, %v485
  %v858 = vpack.c.b16 %v490, %v486
  %v859 = vpack.c.b16 %v495, %v491
  %v860 = vpack.c.b16 %v496, %v492
  %v861 = vpack.c.b16 %v497, %v493
  %v862 = vpack.c.b16 %v498, %v494
  %v863 = vpack.c.b16 %v503, %v499
  %v864 = vpack.c.b16 %v504, %v500
  %v865 = vpack.c.b16 %v505, %v501
  %v866 = vpack.c.b16 %v506, %v502
  %v867 = vpack.c.b16 %v511, %v507
  %v868 = vpack.c.b16 %v512, %v508
  %v869 = vpack.c.b16 %v513, %v509
  %v870 = vpack.c.b16 %v514, %v510
  %v871 = vpack.c.b16 %v519, %v515
  %v872 = vpack.c.b16 %v520, %v516
  %v873 = vpack.c.b16 %v521, %v517
  %v874 = vpack.c.b16 %v522, %v518
  %v875 = vpack.c.b16 %v527, %v523
  %v876 = vpack.c.b16 %v528, %v524
  %v877 = vpack.c.b16 %v529, %v525
  %v878 = vpack.c.b16 %v530, %v526
  %v879 = vpack.c.b16 %v535, %v531
  %v880 = vpack.c.b16 %v536, %v532
  %v881 = vpack.c.b16 %v537, %v533
  %v882 = vpack.c.b16 %v538, %v534
  %v883 = vpack.c.b16 %v543, %v539
  %v884 = vpack.c.b16 %v544, %v540
  %v885 = vpack.c.b16 %v545, %v541
  %v886 = vpack.c.b16 %v546, %v542
  %v887 = vpack.c.b16 %v551, %v547
  %v888 = vpack.c.b16 %v552, %v548
  %v889 = vpack.c.b16 %v553, %v549
  %v890 = vpack.c.b16 %v554, %v550
  %v891 = vpack.c.b16 %v559, %v555
  %v892 = vpack.c.b16 %v560, %v556
  %v893 = vpack.c.b16 %v561, %v557
  %v894 = vpack.c.b16 %v562, %v558
  %v895 = vpack.c.b16 %v567, %v563
  %v896 = vpack.c.b16 %v568, %v564
  %v897 = vpack.c.b16 %v569, %v565
  %v898 = vpack.c.b16 %v570, %v566
  %v899 = vpack.c.b16 %v575, %v571
  %v900 = vpack.c.b16 %v576, %v572
  %v901 = vpack.c.b16 %v577, %v573
  %v902 = vpack.c.b16 %v578, %v574
  %v903 = vpack.c.b16 %v583, %v579
  %v904 = vpack.c.b16 %v584, %v580
  %v905 = vpack.c.b16 %v585, %v581
  %v906 = vpack.c.b16 %v586, %v582
  %v907 = vpack.c.b16 %v591, %v587
  %v908 = vpack.c.b16 %v592, %v588
  %v909 = vpack.c.b16 %v593, %v589
  %v910 = vpack.c.b16 %v594, %v590
  %v911 = vpack.c.b16 %v599, %v595
  %v912 = vpack.c.b16 %v600, %v596
  %v913 = vpack.c.b16 %v601, %v597
  %v914 = vpack.c.b16 %v602, %v598
  %v915 = vpack.c.b16 %v607, %v603
  %v916 = vpack.c.b16 %v608, %v604
  %v917 = vpack.c.b16 %v609, %v605
  %v918 = vpack.c.b16 %v610, %v606
  %v919 = vpack.c.b16 %v615, %v611
  %v920 = vpack.c.b16 %v616, %v612
  %v921 = vpack.c.b16 %v617, %v613
  %v922 = vpack.c.b16 %v618, %v614
  %v923 = vpack.c.b16 %v623, %v619
  %v924 = vpack.c.b16 %v624, %v620
  %v925 = vpack.c.b16 %v625, %v621
  %v926 = vpack.c.b16 %v626, %v622
  %v927 = vpack.c.b16 %v631, %v627
  %v928 = vpack.c.b16 %v632, %v628
  %v929 = vpack.c.b16 %v633, %v629
  %v930 = vpack.c.b16 %v634, %v630
  %v931 = vpack.c.b16 %v639, %v635
  %v932 = vpack.c.b16 %v640, %v636
  %v933 = vpack.c.b16 %v641, %v637
  %v934 = vpack.c.b16 %v642, %v638
  %v935 = vpack.c.b16 %v647, %v643
  %v936 = vpack.c.b16 %v648, %v644
  %v937 = vpack.c.b16 %v649, %v645
  %v938 = vpack.c.b16 %v650, %v646
  %v939 = vpack.c.b16 %v655, %v651
  %v940 = vpack.c.b16 %v656, %v652
  %v941 = vpack.c.b16 %v657, %v653
  %v942 = vpack.c.b16 %v658, %v654
  %v943 = vpack.c.b16 %v663, %v659
  %v944 = vpack.c.b16 %v664, %v660
  %v945 = vpack.c.b16 %v665, %v661
  %v946 = vpack.c.b16 %v666, %v662
  %v947 = vpack.c.b16 %v671, %v667
  %v948 = vpack.c.b16 %v672, %v668
  %v949 = vpack.c.b16 %v673, %v669
  %v950 = vpack.c.b16 %v674, %v670
  %v951 = vpack.c.b16 %v679, %v675
  %v952 = vpack.c.b16 %v680, %v676
  %v953 = vpack.c.b16 %v681, %v677
  %v954 = vpack.c.b16 %v682, %v678
  %v955 = vpack.c.b16 %v687, %v683
  %v956 = vpack.c.b16 %v688, %v684
  %v957 = vpack.c.b16 %v689, %v685
  %v958 = vpack.c.b16 %v690, %v686
  %v959 = vpack.c.b16 %v695, %v691
  %v960 = vpack.c.b16 %v696, %v692
  %v961 = vpack.c.b16 %v697, %v693
  %v962 = vpack.c.b16 %v698, %v694
  %v963 = vpack.c.b16 %v703, %v699
  %v964 = vpack.c.b16 %v704, %v700
  %v965 = vpack.c.b16 %v705, %v701
  %v966 = vpack.c.b16 %v706, %v702
  %v967 = vpack.c.b16 %v711, %v707
  %v968 = vpack.c.b16 %v712, %v708
  %v969 = vpack.c.b16 %v713, %v709
  %v970 = vpack.c.b16 %v714, %v710
  %v971 = vpack.c.b16 %v719, %v715
  %v972 = vpack.c.b16 %v720, %v716
  %v973 = vpack.c.b16 %v721, %v717
  %v974 = vpack.c.b16 %v722, %v718
  %v975 = vpack.c.b16 %v727, %v723
  %v976 = vpack.c.b16 %v728, %v724
  %v977 = vpack.c.b16 %v729, %v725
  %v978 = vpack.c.b16 %v730, %v726
  %v979 = vpack.c.b16 %v735, %v731
  %v980 = vpack.c.b16 %v736, %v732
  %v981 = vpack.c.b16 %v737, %v733
  %v982 = vpack.c.b16 %v738, %v734
  %v983 = vpack.c.b16 %v743, %v739
  %v984 = vpack.c.b16 %v744, %v740
  %v985 = vpack.c.b16 %v745, %v741
  %v986 = vpack.c.b16 %v746, %v742
  %v987 = vpack.c.b16 %v751, %v747
  %v988 = vpack.c.b16 %v752, %v748
  %v989 = vpack.c.b16 %v753, %v749
  %v990 = vpack.c.b16 %v754, %v750
  %v991 = vpack.c.b16 %v759, %v755
  %v992 = vpack.c.b16 %v760, %v756
  %v993 = vpack.c.b16 %v761, %v757
  %v994 = vpack.c.b16 %v762, %v758
  %v995 = vpack.c.b16 %v767, %v763
  %v996 = vpack.c.b16 %v768, %v764
  %v997 = vpack.c.b16 %v769, %v765
  %v998 = vpack.c.b16 %v770, %v766
  %v999 = vpack.c.b16 %v775, %v771
  %v1000 = vpack.c.b16 %v776, %v772
  %v1001 = vpack.c.b16 %v777, %v773
  %v1002 = vpack.c.b16 %v778, %v774
  %v1003 = vpack.c.b16 %v783, %v779
  %v1004 = vpack.c.b16 %v784, %v780
  %v1005 = vpack.c.b16 %v785, %v781
  %v1006 = vpack.c.b16 %v786, %v782
  %v1007 = vpack.c.b16 %v791, %v787
  %v1008 = vpack.c.b16 %v792, %v788
  %v1009 = vpack.c.b16 %v793, %v789
  %v1010 = vpack.c.b16 %v794, %v790
  %v1011 = vpack.c.b16 %v799, %v795
  %v1012 = vpack.c.b16 %v800, %v796
  %v1013 = vpack.c.b16 %v801, %v797
  %v1014 = vpack.c.b16 %v802, %v798
  %v1015 = vpack.c.b16 %v807, %v803
  %v1016 = vpack.c.b16 %v808, %v804
  %v1017 = vpack.c.b16 %v809, %v805
  %v1018 = vpack.c.b16 %v810, %v806
  %v1019 = vpack.c.b16 %v815, %v811
  %v1020 = vpack.c.b16 %v816, %v812
  %v1021 = vpack.c.b16 %v817, %v813
  %v1022 = vpack.c.b16 %v818, %v814
  %v1023 = vpack.c.b16 %v823, %v819
  %v1024 = vpack.c.b16 %v824, %v820
  %v1025 = vpack.c.b16 %v825, %v821
  %v1026 = vpack.c.b16 %v826, %v822
  %v1027 = vpack.c.b16 %v831, %v827
  %v1028 = vpack.c.b16 %v832, %v828
  %v1029 = vpack.c.b16 %v833, %v829
  %v1030 = vpack.c.b16 %v834, %v830
  %vm1227 = vcmask 130048
  %v1229 = vsel %vm1227, %v40, 0
  %1231 = vmatpush.bf16.msra.mxu0 %v863
  %1232 = vmatpush.bf16.msra.mxu0 %v859
  %1233 = vmatpush.bf16.msra.mxu0 %v855
  %1234 = vmatpush.bf16.msra.mxu0 %v851
  %1235 = vmatpush.bf16.msra.mxu0 %v847
  %1236 = vmatpush.bf16.msra.mxu0 %v843
  %1237 = vmatpush.bf16.msra.mxu0 %v839
  %1238 = vmatpush.bf16.msra.mxu0 %v835
  %1239 = vmatmul.bf16.gmra.mxu0 %v34
  %v1240 = vpop.f32.mrf.mxu0
  %v1241 = vadd.f32 %v239, %v1240
  %v1242 = vpop.f32.mrf.mxu0
  %1243 = vdwg.mxu0
  %1244 = vmatpush.bf16.msra.mxu0 %v895
  %1245 = vmatpush.bf16.msra.mxu0 %v891
  %1246 = vmatpush.bf16.msra.mxu0 %v887
  %1247 = vmatpush.bf16.msra.mxu0 %v883
  %1248 = vmatpush.bf16.msra.mxu0 %v879
  %1249 = vmatpush.bf16.msra.mxu0 %v875
  %1250 = vmatpush.bf16.msra.mxu0 %v871
  %1251 = vmatpush.bf16.msra.mxu0 %v867
  %1252 = vmatmul.bf16.gmra.mxu0 %v35
  %v1253 = vpop.f32.mrf.mxu0
  %v1254 = vadd.f32 %v1241, %v1253
  %v1255 = vpop.f32.mrf.mxu0
  %1256 = vdwg.mxu0
  %1257 = vmatpush.bf16.msra.mxu0 %v927
  %1258 = vmatpush.bf16.msra.mxu0 %v923
  %1259 = vmatpush.bf16.msra.mxu0 %v919
  %1260 = vmatpush.bf16.msra.mxu0 %v915
  %1261 = vmatpush.bf16.msra.mxu0 %v911
  %1262 = vmatpush.bf16.msra.mxu0 %v907
  %1263 = vmatpush.bf16.msra.mxu0 %v903
  %1264 = vmatpush.bf16.msra.mxu0 %v899
  %1265 = vmatmul.bf16.gmra.mxu0 %v36
  %v1266 = vpop.f32.mrf.mxu0
  %v1267 = vadd.f32 %v1254, %v1266
  %v1268 = vpop.f32.mrf.mxu0
  %1269 = vdwg.mxu0
  %1270 = vmatpush.bf16.msra.mxu0 %v959
  %1271 = vmatpush.bf16.msra.mxu0 %v955
  %1272 = vmatpush.bf16.msra.mxu0 %v951
  %1273 = vmatpush.bf16.msra.mxu0 %v947
  %1274 = vmatpush.bf16.msra.mxu0 %v943
  %1275 = vmatpush.bf16.msra.mxu0 %v939
  %1276 = vmatpush.bf16.msra.mxu0 %v935
  %1277 = vmatpush.bf16.msra.mxu0 %v931
  %1278 = vmatmul.bf16.gmra.mxu0 %v37
  %v1279 = vpop.f32.mrf.mxu0
  %v1280 = vadd.f32 %v1267, %v1279
  %v1281 = vpop.f32.mrf.mxu0
  %1282 = vdwg.mxu0
  %1283 = vmatpush.bf16.msra.mxu0 %v991
  %1284 = vmatpush.bf16.msra.mxu0 %v987
  %1285 = vmatpush.bf16.msra.mxu0 %v983
  %1286 = vmatpush.bf16.msra.mxu0 %v979
  %1287 = vmatpush.bf16.msra.mxu0 %v975
  %1288 = vmatpush.bf16.msra.mxu0 %v971
  %1289 = vmatpush.bf16.msra.mxu0 %v967
  %1290 = vmatpush.bf16.msra.mxu0 %v963
  %1291 = vmatmul.bf16.gmra.mxu0 %v38
  %v1292 = vpop.f32.mrf.mxu0
  %v1293 = vadd.f32 %v1280, %v1292
  %v1294 = vpop.f32.mrf.mxu0
  %1295 = vdwg.mxu0
  %1296 = vmatpush.bf16.msra.mxu0 %v1023
  %1297 = vmatpush.bf16.msra.mxu0 %v1019
  %1298 = vmatpush.bf16.msra.mxu0 %v1015
  %1299 = vmatpush.bf16.msra.mxu0 %v1011
  %1300 = vmatpush.bf16.msra.mxu0 %v1007
  %1301 = vmatpush.bf16.msra.mxu0 %v1003
  %1302 = vmatpush.bf16.msra.mxu0 %v999
  %1303 = vmatpush.bf16.msra.mxu0 %v995
  %1304 = vmatmul.bf16.gmra.mxu0 %v39
  %v1305 = vpop.f32.mrf.mxu0
  %v1306 = vadd.f32 %v1293, %v1305
  %v1307 = vpop.f32.mrf.mxu0
  %1308 = vdwg.mxu0
  %1309 = vmatpush.bf16.msra.mxu0 0
  %1310 = vmatpush.bf16.msra.mxu0 0
  %1311 = vmatpush.bf16.msra.mxu0 0
  %1312 = vmatpush.bf16.msra.mxu0 0
  %1313 = vmatpush.bf16.msra.mxu0 0
  %1314 = vmatpush.bf16.msra.mxu0 0
  %1315 = vmatpush.bf16.msra.mxu0 0
  %1316 = vmatpush.bf16.msra.mxu0 %v1027
  %1317 = vmatmul.bf16.gmra.mxu0 %v1229
  %v1318 = vpop.f32.mrf.mxu0
  %v1319 = vadd.f32 %v1306, %v1318
  %v1320 = vpop.f32.mrf.mxu0
  %1321 = vdwg.mxu0
  %1322 = vmatpush.bf16.msra.mxu0 %v864
  %1323 = vmatpush.bf16.msra.mxu0 %v860
  %1324 = vmatpush.bf16.msra.mxu0 %v856
  %1325 = vmatpush.bf16.msra.mxu0 %v852
  %1326 = vmatpush.bf16.msra.mxu0 %v848
  %1327 = vmatpush.bf16.msra.mxu0 %v844
  %1328 = vmatpush.bf16.msra.mxu0 %v840
  %1329 = vmatpush.bf16.msra.mxu0 %v836
  %1330 = vmatmul.bf16.gmra.mxu0 %v34
  %v1331 = vpop.f32.mrf.mxu0
  %v1332 = vadd.f32 %v240, %v1331
  %v1333 = vpop.f32.mrf.mxu0
  %1334 = vdwg.mxu0
  %1335 = vmatpush.bf16.msra.mxu0 %v896
  %1336 = vmatpush.bf16.msra.mxu0 %v892
  %1337 = vmatpush.bf16.msra.mxu0 %v888
  %1338 = vmatpush.bf16.msra.mxu0 %v884
  %1339 = vmatpush.bf16.msra.mxu0 %v880
  %1340 = vmatpush.bf16.msra.mxu0 %v876
  %1341 = vmatpush.bf16.msra.mxu0 %v872
  %1342 = vmatpush.bf16.msra.mxu0 %v868
  %1343 = vmatmul.bf16.gmra.mxu0 %v35
  %v1344 = vpop.f32.mrf.mxu0
  %v1345 = vadd.f32 %v1332, %v1344
  %v1346 = vpop.f32.mrf.mxu0
  %1347 = vdwg.mxu0
  %1348 = vmatpush.bf16.msra.mxu0 %v928
  %1349 = vmatpush.bf16.msra.mxu0 %v924
  %1350 = vmatpush.bf16.msra.mxu0 %v920
  %1351 = vmatpush.bf16.msra.mxu0 %v916
  %1352 = vmatpush.bf16.msra.mxu0 %v912
  %1353 = vmatpush.bf16.msra.mxu0 %v908
  %1354 = vmatpush.bf16.msra.mxu0 %v904
  %1355 = vmatpush.bf16.msra.mxu0 %v900
  %1356 = vmatmul.bf16.gmra.mxu0 %v36
  %v1357 = vpop.f32.mrf.mxu0
  %v1358 = vadd.f32 %v1345, %v1357
  %v1359 = vpop.f32.mrf.mxu0
  %1360 = vdwg.mxu0
  %1361 = vmatpush.bf16.msra.mxu0 %v960
  %1362 = vmatpush.bf16.msra.mxu0 %v956
  %1363 = vmatpush.bf16.msra.mxu0 %v952
  %1364 = vmatpush.bf16.msra.mxu0 %v948
  %1365 = vmatpush.bf16.msra.mxu0 %v944
  %1366 = vmatpush.bf16.msra.mxu0 %v940
  %1367 = vmatpush.bf16.msra.mxu0 %v936
  %1368 = vmatpush.bf16.msra.mxu0 %v932
  %1369 = vmatmul.bf16.gmra.mxu0 %v37
  %v1370 = vpop.f32.mrf.mxu0
  %v1371 = vadd.f32 %v1358, %v1370
  %v1372 = vpop.f32.mrf.mxu0
  %1373 = vdwg.mxu0
  %1374 = vmatpush.bf16.msra.mxu0 %v992
  %1375 = vmatpush.bf16.msra.mxu0 %v988
  %1376 = vmatpush.bf16.msra.mxu0 %v984
  %1377 = vmatpush.bf16.msra.mxu0 %v980
  %1378 = vmatpush.bf16.msra.mxu0 %v976
  %1379 = vmatpush.bf16.msra.mxu0 %v972
  %1380 = vmatpush.bf16.msra.mxu0 %v968
  %1381 = vmatpush.bf16.msra.mxu0 %v964
  %1382 = vmatmul.bf16.gmra.mxu0 %v38
  %v1383 = vpop.f32.mrf.mxu0
  %v1384 = vadd.f32 %v1371, %v1383
  %v1385 = vpop.f32.mrf.mxu0
  %1386 = vdwg.mxu0
  %1387 = vmatpush.bf16.msra.mxu0 %v1024
  %1388 = vmatpush.bf16.msra.mxu0 %v1020
  %1389 = vmatpush.bf16.msra.mxu0 %v1016
  %1390 = vmatpush.bf16.msra.mxu0 %v1012
  %1391 = vmatpush.bf16.msra.mxu0 %v1008
  %1392 = vmatpush.bf16.msra.mxu0 %v1004
  %1393 = vmatpush.bf16.msra.mxu0 %v1000
  %1394 = vmatpush.bf16.msra.mxu0 %v996
  %1395 = vmatmul.bf16.gmra.mxu0 %v39
  %v1396 = vpop.f32.mrf.mxu0
  %v1397 = vadd.f32 %v1384, %v1396
  %v1398 = vpop.f32.mrf.mxu0
  %1399 = vdwg.mxu0
  %1400 = vmatpush.bf16.msra.mxu0 0
  %1401 = vmatpush.bf16.msra.mxu0 0
  %1402 = vmatpush.bf16.msra.mxu0 0
  %1403 = vmatpush.bf16.msra.mxu0 0
  %1404 = vmatpush.bf16.msra.mxu0 0
  %1405 = vmatpush.bf16.msra.mxu0 0
  %1406 = vmatpush.bf16.msra.mxu0 0
  %1407 = vmatpush.bf16.msra.mxu0 %v1028
  %1408 = vmatmul.bf16.gmra.mxu0 %v1229
  %v1409 = vpop.f32.mrf.mxu0
  %v1410 = vadd.f32 %v1397, %v1409
  %v1411 = vpop.f32.mrf.mxu0
  %1412 = vdwg.mxu0
  %1413 = vmatpush.bf16.msra.mxu0 %v865
  %1414 = vmatpush.bf16.msra.mxu0 %v861
  %1415 = vmatpush.bf16.msra.mxu0 %v857
  %1416 = vmatpush.bf16.msra.mxu0 %v853
  %1417 = vmatpush.bf16.msra.mxu0 %v849
  %1418 = vmatpush.bf16.msra.mxu0 %v845
  %1419 = vmatpush.bf16.msra.mxu0 %v841
  %1420 = vmatpush.bf16.msra.mxu0 %v837
  %1421 = vmatmul.bf16.gmra.mxu0 %v34
  %v1422 = vpop.f32.mrf.mxu0
  %v1423 = vadd.f32 %v241, %v1422
  %v1424 = vpop.f32.mrf.mxu0
  %1425 = vdwg.mxu0
  %1426 = vmatpush.bf16.msra.mxu0 %v897
  %1427 = vmatpush.bf16.msra.mxu0 %v893
  %1428 = vmatpush.bf16.msra.mxu0 %v889
  %1429 = vmatpush.bf16.msra.mxu0 %v885
  %1430 = vmatpush.bf16.msra.mxu0 %v881
  %1431 = vmatpush.bf16.msra.mxu0 %v877
  %1432 = vmatpush.bf16.msra.mxu0 %v873
  %1433 = vmatpush.bf16.msra.mxu0 %v869
  %1434 = vmatmul.bf16.gmra.mxu0 %v35
  %v1435 = vpop.f32.mrf.mxu0
  %v1436 = vadd.f32 %v1423, %v1435
  %v1437 = vpop.f32.mrf.mxu0
  %1438 = vdwg.mxu0
  %1439 = vmatpush.bf16.msra.mxu0 %v929
  %1440 = vmatpush.bf16.msra.mxu0 %v925
  %1441 = vmatpush.bf16.msra.mxu0 %v921
  %1442 = vmatpush.bf16.msra.mxu0 %v917
  %1443 = vmatpush.bf16.msra.mxu0 %v913
  %1444 = vmatpush.bf16.msra.mxu0 %v909
  %1445 = vmatpush.bf16.msra.mxu0 %v905
  %1446 = vmatpush.bf16.msra.mxu0 %v901
  %1447 = vmatmul.bf16.gmra.mxu0 %v36
  %v1448 = vpop.f32.mrf.mxu0
  %v1449 = vadd.f32 %v1436, %v1448
  %v1450 = vpop.f32.mrf.mxu0
  %1451 = vdwg.mxu0
  %1452 = vmatpush.bf16.msra.mxu0 %v961
  %1453 = vmatpush.bf16.msra.mxu0 %v957
  %1454 = vmatpush.bf16.msra.mxu0 %v953
  %1455 = vmatpush.bf16.msra.mxu0 %v949
  %1456 = vmatpush.bf16.msra.mxu0 %v945
  %1457 = vmatpush.bf16.msra.mxu0 %v941
  %1458 = vmatpush.bf16.msra.mxu0 %v937
  %1459 = vmatpush.bf16.msra.mxu0 %v933
  %1460 = vmatmul.bf16.gmra.mxu0 %v37
  %v1461 = vpop.f32.mrf.mxu0
  %v1462 = vadd.f32 %v1449, %v1461
  %v1463 = vpop.f32.mrf.mxu0
  %1464 = vdwg.mxu0
  %1465 = vmatpush.bf16.msra.mxu0 %v993
  %1466 = vmatpush.bf16.msra.mxu0 %v989
  %1467 = vmatpush.bf16.msra.mxu0 %v985
  %1468 = vmatpush.bf16.msra.mxu0 %v981
  %1469 = vmatpush.bf16.msra.mxu0 %v977
  %1470 = vmatpush.bf16.msra.mxu0 %v973
  %1471 = vmatpush.bf16.msra.mxu0 %v969
  %1472 = vmatpush.bf16.msra.mxu0 %v965
  %1473 = vmatmul.bf16.gmra.mxu0 %v38
  %v1474 = vpop.f32.mrf.mxu0
  %v1475 = vadd.f32 %v1462, %v1474
  %v1476 = vpop.f32.mrf.mxu0
  %1477 = vdwg.mxu0
  %1478 = vmatpush.bf16.msra.mxu0 %v1025
  %1479 = vmatpush.bf16.msra.mxu0 %v1021
  %1480 = vmatpush.bf16.msra.mxu0 %v1017
  %1481 = vmatpush.bf16.msra.mxu0 %v1013
  %1482 = vmatpush.bf16.msra.mxu0 %v1009
  %1483 = vmatpush.bf16.msra.mxu0 %v1005
  %1484 = vmatpush.bf16.msra.mxu0 %v1001
  %1485 = vmatpush.bf16.msra.mxu0 %v997
  %1486 = vmatmul.bf16.gmra.mxu0 %v39
  %v1487 = vpop.f32.mrf.mxu0
  %v1488 = vadd.f32 %v1475, %v1487
  %v1489 = vpop.f32.mrf.mxu0
  %1490 = vdwg.mxu0
  %1491 = vmatpush.bf16.msra.mxu0 0
  %1492 = vmatpush.bf16.msra.mxu0 0
  %1493 = vmatpush.bf16.msra.mxu0 0
  %1494 = vmatpush.bf16.msra.mxu0 0
  %1495 = vmatpush.bf16.msra.mxu0 0
  %1496 = vmatpush.bf16.msra.mxu0 0
  %1497 = vmatpush.bf16.msra.mxu0 0
  %1498 = vmatpush.bf16.msra.mxu0 %v1029
  %1499 = vmatmul.bf16.gmra.mxu0 %v1229
  %v1500 = vpop.f32.mrf.mxu0
  %v1501 = vadd.f32 %v1488, %v1500
  %v1502 = vpop.f32.mrf.mxu0
  %1503 = vdwg.mxu0
  %1504 = vmatpush.bf16.msra.mxu0 %v866
  %1505 = vmatpush.bf16.msra.mxu0 %v862
  %1506 = vmatpush.bf16.msra.mxu0 %v858
  %1507 = vmatpush.bf16.msra.mxu0 %v854
  %1508 = vmatpush.bf16.msra.mxu0 %v850
  %1509 = vmatpush.bf16.msra.mxu0 %v846
  %1510 = vmatpush.bf16.msra.mxu0 %v842
  %1511 = vmatpush.bf16.msra.mxu0 %v838
  %1512 = vmatmul.bf16.gmra.mxu0 %v34
  %v1513 = vpop.f32.mrf.mxu0
  %v1514 = vadd.f32 %v242, %v1513
  %v1515 = vpop.f32.mrf.mxu0
  %1516 = vdwg.mxu0
  %1517 = vmatpush.bf16.msra.mxu0 %v898
  %1518 = vmatpush.bf16.msra.mxu0 %v894
  %1519 = vmatpush.bf16.msra.mxu0 %v890
  %1520 = vmatpush.bf16.msra.mxu0 %v886
  %1521 = vmatpush.bf16.msra.mxu0 %v882
  %1522 = vmatpush.bf16.msra.mxu0 %v878
  %1523 = vmatpush.bf16.msra.mxu0 %v874
  %1524 = vmatpush.bf16.msra.mxu0 %v870
  %1525 = vmatmul.bf16.gmra.mxu0 %v35
  %v1526 = vpop.f32.mrf.mxu0
  %v1527 = vadd.f32 %v1514, %v1526
  %v1528 = vpop.f32.mrf.mxu0
  %1529 = vdwg.mxu0
  %1530 = vmatpush.bf16.msra.mxu0 %v930
  %1531 = vmatpush.bf16.msra.mxu0 %v926
  %1532 = vmatpush.bf16.msra.mxu0 %v922
  %1533 = vmatpush.bf16.msra.mxu0 %v918
  %1534 = vmatpush.bf16.msra.mxu0 %v914
  %1535 = vmatpush.bf16.msra.mxu0 %v910
  %1536 = vmatpush.bf16.msra.mxu0 %v906
  %1537 = vmatpush.bf16.msra.mxu0 %v902
  %1538 = vmatmul.bf16.gmra.mxu0 %v36
  %v1539 = vpop.f32.mrf.mxu0
  %v1540 = vadd.f32 %v1527, %v1539
  %v1541 = vpop.f32.mrf.mxu0
  %1542 = vdwg.mxu0
  %1543 = vmatpush.bf16.msra.mxu0 %v962
  %1544 = vmatpush.bf16.msra.mxu0 %v958
  %1545 = vmatpush.bf16.msra.mxu0 %v954
  %1546 = vmatpush.bf16.msra.mxu0 %v950
  %1547 = vmatpush.bf16.msra.mxu0 %v946
  %1548 = vmatpush.bf16.msra.mxu0 %v942
  %1549 = vmatpush.bf16.msra.mxu0 %v938
  %1550 = vmatpush.bf16.msra.mxu0 %v934
  %1551 = vmatmul.bf16.gmra.mxu0 %v37
  %v1552 = vpop.f32.mrf.mxu0
  %v1553 = vadd.f32 %v1540, %v1552
  %v1554 = vpop.f32.mrf.mxu0
  %1555 = vdwg.mxu0
  %1556 = vmatpush.bf16.msra.mxu0 %v994
  %1557 = vmatpush.bf16.msra.mxu0 %v990
  %1558 = vmatpush.bf16.msra.mxu0 %v986
  %1559 = vmatpush.bf16.msra.mxu0 %v982
  %1560 = vmatpush.bf16.msra.mxu0 %v978
  %1561 = vmatpush.bf16.msra.mxu0 %v974
  %1562 = vmatpush.bf16.msra.mxu0 %v970
  %1563 = vmatpush.bf16.msra.mxu0 %v966
  %1564 = vmatmul.bf16.gmra.mxu0 %v38
  %v1565 = vpop.f32.mrf.mxu0
  %v1566 = vadd.f32 %v1553, %v1565
  %v1567 = vpop.f32.mrf.mxu0
  %1568 = vdwg.mxu0
  %1569 = vmatpush.bf16.msra.mxu0 %v1026
  %1570 = vmatpush.bf16.msra.mxu0 %v1022
  %1571 = vmatpush.bf16.msra.mxu0 %v1018
  %1572 = vmatpush.bf16.msra.mxu0 %v1014
  %1573 = vmatpush.bf16.msra.mxu0 %v1010
  %1574 = vmatpush.bf16.msra.mxu0 %v1006
  %1575 = vmatpush.bf16.msra.mxu0 %v1002
  %1576 = vmatpush.bf16.msra.mxu0 %v998
  %1577 = vmatmul.bf16.gmra.mxu0 %v39
  %v1578 = vpop.f32.mrf.mxu0
  %v1579 = vadd.f32 %v1566, %v1578
  %v1580 = vpop.f32.mrf.mxu0
  %1581 = vdwg.mxu0
  %1582 = vmatpush.bf16.msra.mxu0 0
  %1583 = vmatpush.bf16.msra.mxu0 0
  %1584 = vmatpush.bf16.msra.mxu0 0
  %1585 = vmatpush.bf16.msra.mxu0 0
  %1586 = vmatpush.bf16.msra.mxu0 0
  %1587 = vmatpush.bf16.msra.mxu0 0
  %1588 = vmatpush.bf16.msra.mxu0 0
  %1589 = vmatpush.bf16.msra.mxu0 %v1030
  %1590 = vmatmul.bf16.gmra.mxu0 %v1229
  %v1591 = vpop.f32.mrf.mxu0
  %v1592 = vadd.f32 %v1579, %v1591
  %v1593 = vpop.f32.mrf.mxu0
  %1594 = vdwg.mxu0
  %v1595 = vmax.f32 %v1319, 0.0
  %v1596 = vmax.f32 %v1410, 0.0
  %v1597 = vmax.f32 %v1501, 0.0
  %v1598 = vmax.f32 %v1592, 0.0
  %v1599 = vpack.c.bf16 %v1595, %v1595
  %v1600 = vpack.c.bf16 %v1596, %v1596
  %v1601 = vpack.c.bf16 %v1597, %v1597
  %v1602 = vpack.c.bf16 %v1598, %v1598
  %v1603 = vld [vmem:[%s3] sm:$0xff]
  %v1604 = vld [vmem:[%s3 + $0x8] sm:$0xff]
  %v1605 = vld [vmem:[%s3 + $0x10] sm:$0xff]
  %v1606 = vld [vmem:[%s3 + $0x18] sm:$0xff]
  %v1607 = vld [vmem:[%s3 + $0x20] sm:$0xff]
  %v1608 = vld [vmem:[%s3 + $0x28] sm:$0xff]
  %v1609 = vld [vmem:[%s3 + $0x30] sm:$0xff]
  %v1610 = vld [vmem:[%s3 + $0x38] sm:$0xff]
  %v1611 = vld [vmem:[%s3 + $0x40] sm:$0xff]
  %v1612 = vld [vmem:[%s3 + $0x48] sm:$0xff]
  %v1613 = vld [vmem:[%s3 + $0x50] sm:$0xff]
  %v1614 = vld [vmem:[%s3 + $0x58] sm:$0xff]
  %v1615 = vld [vmem:[%s3 + $0x60] sm:$0xff]
  %v1616 = vld [vmem:[%s3 + $0x68] sm:$0xff]
  %v1617 = vld [vmem:[%s3 + $0x70] sm:$0xff]
  %v1618 = vld [vmem:[%s3 + $0x78] sm:$0xff]
  %v1619 = vld [vmem:[%s3 + $0x80] sm:$0xff]
  %v1620 = vld [vmem:[%s3 + $0x88] sm:$0xff]
  %v1621 = vld [vmem:[%s3 + $0x90] sm:$0xff]
  %v1622 = vld [vmem:[%s3 + $0x98] sm:$0xff]
  %v1623 = vld [vmem:[%s3 + $0xa0] sm:$0xff]
  %v1624 = vld [vmem:[%s3 + $0xa8] sm:$0xff]
  %v1625 = vld [vmem:[%s3 + $0xb0] sm:$0xff]
  %v1626 = vld [vmem:[%s3 + $0xb8] sm:$0xff]
  %v1627 = vld [vmem:[%s3 + $0xc0] sm:$0xff]
  %v1628 = vld [vmem:[%s3 + $0xc8] sm:$0xff]
  %v1629 = vld [vmem:[%s3 + $0xd0] sm:$0xff]
  %v1630 = vld [vmem:[%s3 + $0xd8] sm:$0xff]
  %v1631 = vld [vmem:[%s3 + $0xe0] sm:$0xff]
  %v1632 = vld [vmem:[%s3 + $0xe8] sm:$0xff]
  %v1633 = vld [vmem:[%s3 + $0xf0] sm:$0xff]
  %v1634 = vld [vmem:[%s3 + $0xf8] sm:$0xff]
  %v1635 = vld [vmem:[%s3 + $0x100] sm:$0xff]
  %v1636 = vld [vmem:[%s3 + $0x108] sm:$0xff]
  %v1637 = vld [vmem:[%s3 + $0x110] sm:$0xff]
  %v1638 = vld [vmem:[%s3 + $0x118] sm:$0xff]
  %v1639 = vld [vmem:[%s3 + $0x120] sm:$0xff]
  %v1640 = vld [vmem:[%s3 + $0x128] sm:$0xff]
  %v1641 = vld [vmem:[%s3 + $0x130] sm:$0xff]
  %v1642 = vld [vmem:[%s3 + $0x138] sm:$0xff]
  %v1643 = vld [vmem:[%s3 + $0x140] sm:$0xff]
  %v1644 = vld [vmem:[%s3 + $0x148] sm:$0xff]
  %v1645 = vld [vmem:[%s3 + $0x150] sm:$0xff]
  %v1646 = vld [vmem:[%s3 + $0x158] sm:$0xff]
  %v1647 = vld [vmem:[%s3 + $0x160] sm:$0xff]
  %v1648 = vld [vmem:[%s3 + $0x168] sm:$0xff]
  %v1649 = vld [vmem:[%s3 + $0x170] sm:$0xff]
  %v1650 = vld [vmem:[%s3 + $0x178] sm:$0xff]
  %v1651 = vld [vmem:[%s3 + $0x180] sm:$0xff]
  %v1652 = vld [vmem:[%s3 + $0x188] sm:$0xff]
  %v1653 = vld [vmem:[%s3 + $0x190] sm:$0xff]
  %v1654 = vld [vmem:[%s3 + $0x198] sm:$0xff]
  %v1655 = vld [vmem:[%s3 + $0x1a0] sm:$0xff]
  %v1656 = vld [vmem:[%s3 + $0x1a8] sm:$0xff]
  %v1657 = vld [vmem:[%s3 + $0x1b0] sm:$0xff]
  %v1658 = vld [vmem:[%s3 + $0x1b8] sm:$0xff]
  %v1659 = vld [vmem:[%s3 + $0x1c0] sm:$0xff]
  %v1660 = vld [vmem:[%s3 + $0x1c8] sm:$0xff]
  %v1661 = vld [vmem:[%s3 + $0x1d0] sm:$0xff]
  %v1662 = vld [vmem:[%s3 + $0x1d8] sm:$0xff]
  %v1663 = vld [vmem:[%s3 + $0x1e0] sm:$0xff]
  %v1664 = vld [vmem:[%s3 + $0x1e8] sm:$0xff]
  %v1665 = vld [vmem:[%s3 + $0x1f0] sm:$0xff]
  %v1666 = vld [vmem:[%s3 + $0x1f8] sm:$0xff]
  %v1667 = vld [vmem:[%s3 + $0x200] sm:$0xff]
  %v1668 = vld [vmem:[%s3 + $0x208] sm:$0xff]
  %v1669 = vld [vmem:[%s3 + $0x210] sm:$0xff]
  %v1670 = vld [vmem:[%s3 + $0x218] sm:$0xff]
  %v1671 = vld [vmem:[%s3 + $0x220] sm:$0xff]
  %v1672 = vld [vmem:[%s3 + $0x228] sm:$0xff]
  %v1673 = vld [vmem:[%s3 + $0x230] sm:$0xff]
  %v1674 = vld [vmem:[%s3 + $0x238] sm:$0xff]
  %v1675 = vld [vmem:[%s3 + $0x240] sm:$0xff]
  %v1676 = vld [vmem:[%s3 + $0x248] sm:$0xff]
  %v1677 = vld [vmem:[%s3 + $0x250] sm:$0xff]
  %v1678 = vld [vmem:[%s3 + $0x258] sm:$0xff]
  %v1679 = vld [vmem:[%s3 + $0x260] sm:$0xff]
  %v1680 = vld [vmem:[%s3 + $0x268] sm:$0xff]
  %v1681 = vld [vmem:[%s3 + $0x270] sm:$0xff]
  %v1682 = vld [vmem:[%s3 + $0x278] sm:$0xff]
  %v1683 = vld [vmem:[%s3 + $0x280] sm:$0xff]
  %v1684 = vld [vmem:[%s3 + $0x288] sm:$0xff]
  %v1685 = vld [vmem:[%s3 + $0x290] sm:$0xff]
  %v1686 = vld [vmem:[%s3 + $0x298] sm:$0xff]
  %v1687 = vld [vmem:[%s3 + $0x2a0] sm:$0xff]
  %v1688 = vld [vmem:[%s3 + $0x2a8] sm:$0xff]
  %v1689 = vld [vmem:[%s3 + $0x2b0] sm:$0xff]
  %v1690 = vld [vmem:[%s3 + $0x2b8] sm:$0xff]
  %v1691 = vld [vmem:[%s3 + $0x2c0] sm:$0xff]
  %v1692 = vld [vmem:[%s3 + $0x2c8] sm:$0xff]
  %v1693 = vld [vmem:[%s3 + $0x2d0] sm:$0xff]
  %v1694 = vld [vmem:[%s3 + $0x2d8] sm:$0xff]
  %v1695 = vld [vmem:[%s3 + $0x2e0] sm:$0xff]
  %v1696 = vld [vmem:[%s3 + $0x2e8] sm:$0xff]
  %v1697 = vld [vmem:[%s3 + $0x2f0] sm:$0xff]
  %v1698 = vld [vmem:[%s3 + $0x2f8] sm:$0xff]
  %v1699 = vld [vmem:[%s3 + $0x300] sm:$0xff]
  %v1700 = vld [vmem:[%s3 + $0x308] sm:$0xff]
  %v1701 = vld [vmem:[%s3 + $0x310] sm:$0xff]
  %v1702 = vld [vmem:[%s3 + $0x318] sm:$0xff]
  %v1703 = vld [vmem:[%s3 + $0x320] sm:$0xff]
  %v1704 = vld [vmem:[%s3 + $0x328] sm:$0xff]
  %v1705 = vld [vmem:[%s3 + $0x330] sm:$0xff]
  %v1706 = vld [vmem:[%s3 + $0x338] sm:$0xff]
  %v1707 = vld [vmem:[%s3 + $0x340] sm:$0xff]
  %v1708 = vld [vmem:[%s3 + $0x348] sm:$0xff]
  %v1709 = vld [vmem:[%s3 + $0x350] sm:$0xff]
  %v1710 = vld [vmem:[%s3 + $0x358] sm:$0xff]
  %v1711 = vld [vmem:[%s3 + $0x360] sm:$0xff]
  %v1712 = vld [vmem:[%s3 + $0x368] sm:$0xff]
  %v1713 = vld [vmem:[%s3 + $0x370] sm:$0xff]
  %v1714 = vld [vmem:[%s3 + $0x378] sm:$0xff]
  %v1715 = vld [vmem:[%s3 + $0x380] sm:$0xff]
  %v1716 = vld [vmem:[%s3 + $0x388] sm:$0xff]
  %v1717 = vld [vmem:[%s3 + $0x390] sm:$0xff]
  %v1718 = vld [vmem:[%s3 + $0x398] sm:$0xff]
  %v1719 = vld [vmem:[%s3 + $0x3a0] sm:$0xff]
  %v1720 = vld [vmem:[%s3 + $0x3a8] sm:$0xff]
  %v1721 = vld [vmem:[%s3 + $0x3b0] sm:$0xff]
  %v1722 = vld [vmem:[%s3 + $0x3b8] sm:$0xff]
  %v1723 = vld [vmem:[%s3 + $0x3c0] sm:$0xff]
  %v1724 = vld [vmem:[%s3 + $0x3c8] sm:$0xff]
  %v1725 = vld [vmem:[%s3 + $0x3d0] sm:$0xff]
  %v1726 = vld [vmem:[%s3 + $0x3d8] sm:$0xff]
  %v1727 = vld [vmem:[%s3 + $0x3e0] sm:$0xff]
  %v1728 = vld [vmem:[%s3 + $0x3e8] sm:$0xff]
  %v1729 = vld [vmem:[%s3 + $0x3f0] sm:$0xff]
  %v1730 = vld [vmem:[%s3 + $0x3f8] sm:$0xff]
  %v1731 = vld [vmem:[%s4] sm:$0xf]
  %v1733 = vperm.slane %v1731, 0
  %v1734 = vperm.slane %v1731, 1
  %v1735 = vperm.slane %v1731, 2
  %v1736 = vperm.slane %v1731, 3
  %v1869 = vunpack.c.l.b16 %v1603
  %v1870 = vunpack.c.h.b16 %v1603
  %v1871 = vunpack.c.l.b16 %v1604
  %v1872 = vunpack.c.h.b16 %v1604
  %v1873 = vunpack.c.l.b16 %v1605
  %v1874 = vunpack.c.h.b16 %v1605
  %v1875 = vunpack.c.l.b16 %v1606
  %v1876 = vunpack.c.h.b16 %v1606
  %v1877 = vunpack.c.l.b16 %v1607
  %v1878 = vunpack.c.h.b16 %v1607
  %v1879 = vunpack.c.l.b16 %v1608
  %v1880 = vunpack.c.h.b16 %v1608
  %v1881 = vunpack.c.l.b16 %v1609
  %v1882 = vunpack.c.h.b16 %v1609
  %v1883 = vunpack.c.l.b16 %v1610
  %v1884 = vunpack.c.h.b16 %v1610
  %v1885 = vunpack.c.l.b16 %v1611
  %v1886 = vunpack.c.h.b16 %v1611
  %v1887 = vunpack.c.l.b16 %v1612
  %v1888 = vunpack.c.h.b16 %v1612
  %v1889 = vunpack.c.l.b16 %v1613
  %v1890 = vunpack.c.h.b16 %v1613
  %v1891 = vunpack.c.l.b16 %v1614
  %v1892 = vunpack.c.h.b16 %v1614
  %v1893 = vunpack.c.l.b16 %v1615
  %v1894 = vunpack.c.h.b16 %v1615
  %v1895 = vunpack.c.l.b16 %v1616
  %v1896 = vunpack.c.h.b16 %v1616
  %v1897 = vunpack.c.l.b16 %v1617
  %v1898 = vunpack.c.h.b16 %v1617
  %v1899 = vunpack.c.l.b16 %v1618
  %v1900 = vunpack.c.h.b16 %v1618
  %v1901 = vunpack.c.l.b16 %v1619
  %v1902 = vunpack.c.h.b16 %v1619
  %v1903 = vunpack.c.l.b16 %v1620
  %v1904 = vunpack.c.h.b16 %v1620
  %v1905 = vunpack.c.l.b16 %v1621
  %v1906 = vunpack.c.h.b16 %v1621
  %v1907 = vunpack.c.l.b16 %v1622
  %v1908 = vunpack.c.h.b16 %v1622
  %v1909 = vunpack.c.l.b16 %v1623
  %v1910 = vunpack.c.h.b16 %v1623
  %v1911 = vunpack.c.l.b16 %v1624
  %v1912 = vunpack.c.h.b16 %v1624
  %v1913 = vunpack.c.l.b16 %v1625
  %v1914 = vunpack.c.h.b16 %v1625
  %v1915 = vunpack.c.l.b16 %v1626
  %v1916 = vunpack.c.h.b16 %v1626
  %v1917 = vunpack.c.l.b16 %v1627
  %v1918 = vunpack.c.h.b16 %v1627
  %v1919 = vunpack.c.l.b16 %v1628
  %v1920 = vunpack.c.h.b16 %v1628
  %v1921 = vunpack.c.l.b16 %v1629
  %v1922 = vunpack.c.h.b16 %v1629
  %v1923 = vunpack.c.l.b16 %v1630
  %v1924 = vunpack.c.h.b16 %v1630
  %v1925 = vunpack.c.l.b16 %v1631
  %v1926 = vunpack.c.h.b16 %v1631
  %v1927 = vunpack.c.l.b16 %v1632
  %v1928 = vunpack.c.h.b16 %v1632
  %v1929 = vunpack.c.l.b16 %v1633
  %v1930 = vunpack.c.h.b16 %v1633
  %v1931 = vunpack.c.l.b16 %v1634
  %v1932 = vunpack.c.h.b16 %v1634
  %v1933 = vunpack.c.l.b16 %v1635
  %v1934 = vunpack.c.h.b16 %v1635
  %v1935 = vunpack.c.l.b16 %v1636
  %v1936 = vunpack.c.h.b16 %v1636
  %v1937 = vunpack.c.l.b16 %v1637
  %v1938 = vunpack.c.h.b16 %v1637
  %v1939 = vunpack.c.l.b16 %v1638
  %v1940 = vunpack.c.h.b16 %v1638
  %v1941 = vunpack.c.l.b16 %v1639
  %v1942 = vunpack.c.h.b16 %v1639
  %v1943 = vunpack.c.l.b16 %v1640
  %v1944 = vunpack.c.h.b16 %v1640
  %v1945 = vunpack.c.l.b16 %v1641
  %v1946 = vunpack.c.h.b16 %v1641
  %v1947 = vunpack.c.l.b16 %v1642
  %v1948 = vunpack.c.h.b16 %v1642
  %v1949 = vunpack.c.l.b16 %v1643
  %v1950 = vunpack.c.h.b16 %v1643
  %v1951 = vunpack.c.l.b16 %v1644
  %v1952 = vunpack.c.h.b16 %v1644
  %v1953 = vunpack.c.l.b16 %v1645
  %v1954 = vunpack.c.h.b16 %v1645
  %v1955 = vunpack.c.l.b16 %v1646
  %v1956 = vunpack.c.h.b16 %v1646
  %v1957 = vunpack.c.l.b16 %v1647
  %v1958 = vunpack.c.h.b16 %v1647
  %v1959 = vunpack.c.l.b16 %v1648
  %v1960 = vunpack.c.h.b16 %v1648
  %v1961 = vunpack.c.l.b16 %v1649
  %v1962 = vunpack.c.h.b16 %v1649
  %v1963 = vunpack.c.l.b16 %v1650
  %v1964 = vunpack.c.h.b16 %v1650
  %v1965 = vunpack.c.l.b16 %v1651
  %v1966 = vunpack.c.h.b16 %v1651
  %v1967 = vunpack.c.l.b16 %v1652
  %v1968 = vunpack.c.h.b16 %v1652
  %v1969 = vunpack.c.l.b16 %v1653
  %v1970 = vunpack.c.h.b16 %v1653
  %v1971 = vunpack.c.l.b16 %v1654
  %v1972 = vunpack.c.h.b16 %v1654
  %v1973 = vunpack.c.l.b16 %v1655
  %v1974 = vunpack.c.h.b16 %v1655
  %v1975 = vunpack.c.l.b16 %v1656
  %v1976 = vunpack.c.h.b16 %v1656
  %v1977 = vunpack.c.l.b16 %v1657
  %v1978 = vunpack.c.h.b16 %v1657
  %v1979 = vunpack.c.l.b16 %v1658
  %v1980 = vunpack.c.h.b16 %v1658
  %v1981 = vunpack.c.l.b16 %v1659
  %v1982 = vunpack.c.h.b16 %v1659
  %v1983 = vunpack.c.l.b16 %v1660
  %v1984 = vunpack.c.h.b16 %v1660
  %v1985 = vunpack.c.l.b16 %v1661
  %v1986 = vunpack.c.h.b16 %v1661
  %v1987 = vunpack.c.l.b16 %v1662
  %v1988 = vunpack.c.h.b16 %v1662
  %v1989 = vunpack.c.l.b16 %v1663
  %v1990 = vunpack.c.h.b16 %v1663
  %v1991 = vunpack.c.l.b16 %v1664
  %v1992 = vunpack.c.h.b16 %v1664
  %v1993 = vunpack.c.l.b16 %v1665
  %v1994 = vunpack.c.h.b16 %v1665
  %v1995 = vunpack.c.l.b16 %v1666
  %v1996 = vunpack.c.h.b16 %v1666
  %v1997 = vunpack.c.l.b16 %v1667
  %v1998 = vunpack.c.h.b16 %v1667
  %v1999 = vunpack.c.l.b16 %v1668
  %v2000 = vunpack.c.h.b16 %v1668
  %v2001 = vunpack.c.l.b16 %v1669
  %v2002 = vunpack.c.h.b16 %v1669
  %v2003 = vunpack.c.l.b16 %v1670
  %v2004 = vunpack.c.h.b16 %v1670
  %v2005 = vunpack.c.l.b16 %v1671
  %v2006 = vunpack.c.h.b16 %v1671
  %v2007 = vunpack.c.l.b16 %v1672
  %v2008 = vunpack.c.h.b16 %v1672
  %v2009 = vunpack.c.l.b16 %v1673
  %v2010 = vunpack.c.h.b16 %v1673
  %v2011 = vunpack.c.l.b16 %v1674
  %v2012 = vunpack.c.h.b16 %v1674
  %v2013 = vunpack.c.l.b16 %v1675
  %v2014 = vunpack.c.h.b16 %v1675
  %v2015 = vunpack.c.l.b16 %v1676
  %v2016 = vunpack.c.h.b16 %v1676
  %v2017 = vunpack.c.l.b16 %v1677
  %v2018 = vunpack.c.h.b16 %v1677
  %v2019 = vunpack.c.l.b16 %v1678
  %v2020 = vunpack.c.h.b16 %v1678
  %v2021 = vunpack.c.l.b16 %v1679
  %v2022 = vunpack.c.h.b16 %v1679
  %v2023 = vunpack.c.l.b16 %v1680
  %v2024 = vunpack.c.h.b16 %v1680
  %v2025 = vunpack.c.l.b16 %v1681
  %v2026 = vunpack.c.h.b16 %v1681
  %v2027 = vunpack.c.l.b16 %v1682
  %v2028 = vunpack.c.h.b16 %v1682
  %v2029 = vunpack.c.l.b16 %v1683
  %v2030 = vunpack.c.h.b16 %v1683
  %v2031 = vunpack.c.l.b16 %v1684
  %v2032 = vunpack.c.h.b16 %v1684
  %v2033 = vunpack.c.l.b16 %v1685
  %v2034 = vunpack.c.h.b16 %v1685
  %v2035 = vunpack.c.l.b16 %v1686
  %v2036 = vunpack.c.h.b16 %v1686
  %v2037 = vunpack.c.l.b16 %v1687
  %v2038 = vunpack.c.h.b16 %v1687
  %v2039 = vunpack.c.l.b16 %v1688
  %v2040 = vunpack.c.h.b16 %v1688
  %v2041 = vunpack.c.l.b16 %v1689
  %v2042 = vunpack.c.h.b16 %v1689
  %v2043 = vunpack.c.l.b16 %v1690
  %v2044 = vunpack.c.h.b16 %v1690
  %v2045 = vunpack.c.l.b16 %v1691
  %v2046 = vunpack.c.h.b16 %v1691
  %v2047 = vunpack.c.l.b16 %v1692
  %v2048 = vunpack.c.h.b16 %v1692
  %v2049 = vunpack.c.l.b16 %v1693
  %v2050 = vunpack.c.h.b16 %v1693
  %v2051 = vunpack.c.l.b16 %v1694
  %v2052 = vunpack.c.h.b16 %v1694
  %v2053 = vunpack.c.l.b16 %v1695
  %v2054 = vunpack.c.h.b16 %v1695
  %v2055 = vunpack.c.l.b16 %v1696
  %v2056 = vunpack.c.h.b16 %v1696
  %v2057 = vunpack.c.l.b16 %v1697
  %v2058 = vunpack.c.h.b16 %v1697
  %v2059 = vunpack.c.l.b16 %v1698
  %v2060 = vunpack.c.h.b16 %v1698
  %v2061 = vunpack.c.l.b16 %v1699
  %v2062 = vunpack.c.h.b16 %v1699
  %v2063 = vunpack.c.l.b16 %v1700
  %v2064 = vunpack.c.h.b16 %v1700
  %v2065 = vunpack.c.l.b16 %v1701
  %v2066 = vunpack.c.h.b16 %v1701
  %v2067 = vunpack.c.l.b16 %v1702
  %v2068 = vunpack.c.h.b16 %v1702
  %v2069 = vunpack.c.l.b16 %v1703
  %v2070 = vunpack.c.h.b16 %v1703
  %v2071 = vunpack.c.l.b16 %v1704
  %v2072 = vunpack.c.h.b16 %v1704
  %v2073 = vunpack.c.l.b16 %v1705
  %v2074 = vunpack.c.h.b16 %v1705
  %v2075 = vunpack.c.l.b16 %v1706
  %v2076 = vunpack.c.h.b16 %v1706
  %v2077 = vunpack.c.l.b16 %v1707
  %v2078 = vunpack.c.h.b16 %v1707
  %v2079 = vunpack.c.l.b16 %v1708
  %v2080 = vunpack.c.h.b16 %v1708
  %v2081 = vunpack.c.l.b16 %v1709
  %v2082 = vunpack.c.h.b16 %v1709
  %v2083 = vunpack.c.l.b16 %v1710
  %v2084 = vunpack.c.h.b16 %v1710
  %v2085 = vunpack.c.l.b16 %v1711
  %v2086 = vunpack.c.h.b16 %v1711
  %v2087 = vunpack.c.l.b16 %v1712
  %v2088 = vunpack.c.h.b16 %v1712
  %v2089 = vunpack.c.l.b16 %v1713
  %v2090 = vunpack.c.h.b16 %v1713
  %v2091 = vunpack.c.l.b16 %v1714
  %v2092 = vunpack.c.h.b16 %v1714
  %v2093 = vunpack.c.l.b16 %v1715
  %v2094 = vunpack.c.h.b16 %v1715
  %v2095 = vunpack.c.l.b16 %v1716
  %v2096 = vunpack.c.h.b16 %v1716
  %v2097 = vunpack.c.l.b16 %v1717
  %v2098 = vunpack.c.h.b16 %v1717
  %v2099 = vunpack.c.l.b16 %v1718
  %v2100 = vunpack.c.h.b16 %v1718
  %v2101 = vunpack.c.l.b16 %v1719
  %v2102 = vunpack.c.h.b16 %v1719
  %v2103 = vunpack.c.l.b16 %v1720
  %v2104 = vunpack.c.h.b16 %v1720
  %v2105 = vunpack.c.l.b16 %v1721
  %v2106 = vunpack.c.h.b16 %v1721
  %v2107 = vunpack.c.l.b16 %v1722
  %v2108 = vunpack.c.h.b16 %v1722
  %v2109 = vunpack.c.l.b16 %v1723
  %v2110 = vunpack.c.h.b16 %v1723
  %v2111 = vunpack.c.l.b16 %v1724
  %v2112 = vunpack.c.h.b16 %v1724
  %v2113 = vunpack.c.l.b16 %v1725
  %v2114 = vunpack.c.h.b16 %v1725
  %v2115 = vunpack.c.l.b16 %v1726
  %v2116 = vunpack.c.h.b16 %v1726
  %v2117 = vunpack.c.l.b16 %v1727
  %v2118 = vunpack.c.h.b16 %v1727
  %v2119 = vunpack.c.l.b16 %v1728
  %v2120 = vunpack.c.h.b16 %v1728
  %v2121 = vunpack.c.l.b16 %v1729
  %v2122 = vunpack.c.h.b16 %v1729
  %v2123 = vunpack.c.l.b16 %v1730
  %v2124 = vunpack.c.h.b16 %v1730
  %v2125 = vpack.c.b16 %v1873, %v1869
  %v2126 = vpack.c.b16 %v1874, %v1870
  %v2127 = vpack.c.b16 %v1875, %v1871
  %v2128 = vpack.c.b16 %v1876, %v1872
  %v2129 = vpack.c.b16 %v1881, %v1877
  %v2130 = vpack.c.b16 %v1882, %v1878
  %v2131 = vpack.c.b16 %v1883, %v1879
  %v2132 = vpack.c.b16 %v1884, %v1880
  %v2133 = vpack.c.b16 %v1889, %v1885
  %v2134 = vpack.c.b16 %v1890, %v1886
  %v2135 = vpack.c.b16 %v1891, %v1887
  %v2136 = vpack.c.b16 %v1892, %v1888
  %v2137 = vpack.c.b16 %v1897, %v1893
  %v2138 = vpack.c.b16 %v1898, %v1894
  %v2139 = vpack.c.b16 %v1899, %v1895
  %v2140 = vpack.c.b16 %v1900, %v1896
  %v2141 = vpack.c.b16 %v1905, %v1901
  %v2142 = vpack.c.b16 %v1906, %v1902
  %v2143 = vpack.c.b16 %v1907, %v1903
  %v2144 = vpack.c.b16 %v1908, %v1904
  %v2145 = vpack.c.b16 %v1913, %v1909
  %v2146 = vpack.c.b16 %v1914, %v1910
  %v2147 = vpack.c.b16 %v1915, %v1911
  %v2148 = vpack.c.b16 %v1916, %v1912
  %v2149 = vpack.c.b16 %v1921, %v1917
  %v2150 = vpack.c.b16 %v1922, %v1918
  %v2151 = vpack.c.b16 %v1923, %v1919
  %v2152 = vpack.c.b16 %v1924, %v1920
  %v2153 = vpack.c.b16 %v1929, %v1925
  %v2154 = vpack.c.b16 %v1930, %v1926
  %v2155 = vpack.c.b16 %v1931, %v1927
  %v2156 = vpack.c.b16 %v1932, %v1928
  %v2157 = vpack.c.b16 %v1937, %v1933
  %v2158 = vpack.c.b16 %v1938, %v1934
  %v2159 = vpack.c.b16 %v1939, %v1935
  %v2160 = vpack.c.b16 %v1940, %v1936
  %v2161 = vpack.c.b16 %v1945, %v1941
  %v2162 = vpack.c.b16 %v1946, %v1942
  %v2163 = vpack.c.b16 %v1947, %v1943
  %v2164 = vpack.c.b16 %v1948, %v1944
  %v2165 = vpack.c.b16 %v1953, %v1949
  %v2166 = vpack.c.b16 %v1954, %v1950
  %v2167 = vpack.c.b16 %v1955, %v1951
  %v2168 = vpack.c.b16 %v1956, %v1952
  %v2169 = vpack.c.b16 %v1961, %v1957
  %v2170 = vpack.c.b16 %v1962, %v1958
  %v2171 = vpack.c.b16 %v1963, %v1959
  %v2172 = vpack.c.b16 %v1964, %v1960
  %v2173 = vpack.c.b16 %v1969, %v1965
  %v2174 = vpack.c.b16 %v1970, %v1966
  %v2175 = vpack.c.b16 %v1971, %v1967
  %v2176 = vpack.c.b16 %v1972, %v1968
  %v2177 = vpack.c.b16 %v1977, %v1973
  %v2178 = vpack.c.b16 %v1978, %v1974
  %v2179 = vpack.c.b16 %v1979, %v1975
  %v2180 = vpack.c.b16 %v1980, %v1976
  %v2181 = vpack.c.b16 %v1985, %v1981
  %v2182 = vpack.c.b16 %v1986, %v1982
  %v2183 = vpack.c.b16 %v1987, %v1983
  %v2184 = vpack.c.b16 %v1988, %v1984
  %v2185 = vpack.c.b16 %v1993, %v1989
  %v2186 = vpack.c.b16 %v1994, %v1990
  %v2187 = vpack.c.b16 %v1995, %v1991
  %v2188 = vpack.c.b16 %v1996, %v1992
  %v2189 = vpack.c.b16 %v2001, %v1997
  %v2190 = vpack.c.b16 %v2002, %v1998
  %v2191 = vpack.c.b16 %v2003, %v1999
  %v2192 = vpack.c.b16 %v2004, %v2000
  %v2193 = vpack.c.b16 %v2009, %v2005
  %v2194 = vpack.c.b16 %v2010, %v2006
  %v2195 = vpack.c.b16 %v2011, %v2007
  %v2196 = vpack.c.b16 %v2012, %v2008
  %v2197 = vpack.c.b16 %v2017, %v2013
  %v2198 = vpack.c.b16 %v2018, %v2014
  %v2199 = vpack.c.b16 %v2019, %v2015
  %v2200 = vpack.c.b16 %v2020, %v2016
  %v2201 = vpack.c.b16 %v2025, %v2021
  %v2202 = vpack.c.b16 %v2026, %v2022
  %v2203 = vpack.c.b16 %v2027, %v2023
  %v2204 = vpack.c.b16 %v2028, %v2024
  %v2205 = vpack.c.b16 %v2033, %v2029
  %v2206 = vpack.c.b16 %v2034, %v2030
  %v2207 = vpack.c.b16 %v2035, %v2031
  %v2208 = vpack.c.b16 %v2036, %v2032
  %v2209 = vpack.c.b16 %v2041, %v2037
  %v2210 = vpack.c.b16 %v2042, %v2038
  %v2211 = vpack.c.b16 %v2043, %v2039
  %v2212 = vpack.c.b16 %v2044, %v2040
  %v2213 = vpack.c.b16 %v2049, %v2045
  %v2214 = vpack.c.b16 %v2050, %v2046
  %v2215 = vpack.c.b16 %v2051, %v2047
  %v2216 = vpack.c.b16 %v2052, %v2048
  %v2217 = vpack.c.b16 %v2057, %v2053
  %v2218 = vpack.c.b16 %v2058, %v2054
  %v2219 = vpack.c.b16 %v2059, %v2055
  %v2220 = vpack.c.b16 %v2060, %v2056
  %v2221 = vpack.c.b16 %v2065, %v2061
  %v2222 = vpack.c.b16 %v2066, %v2062
  %v2223 = vpack.c.b16 %v2067, %v2063
  %v2224 = vpack.c.b16 %v2068, %v2064
  %v2225 = vpack.c.b16 %v2073, %v2069
  %v2226 = vpack.c.b16 %v2074, %v2070
  %v2227 = vpack.c.b16 %v2075, %v2071
  %v2228 = vpack.c.b16 %v2076, %v2072
  %v2229 = vpack.c.b16 %v2081, %v2077
  %v2230 = vpack.c.b16 %v2082, %v2078
  %v2231 = vpack.c.b16 %v2083, %v2079
  %v2232 = vpack.c.b16 %v2084, %v2080
  %v2233 = vpack.c.b16 %v2089, %v2085
  %v2234 = vpack.c.b16 %v2090, %v2086
  %v2235 = vpack.c.b16 %v2091, %v2087
  %v2236 = vpack.c.b16 %v2092, %v2088
  %v2237 = vpack.c.b16 %v2097, %v2093
  %v2238 = vpack.c.b16 %v2098, %v2094
  %v2239 = vpack.c.b16 %v2099, %v2095
  %v2240 = vpack.c.b16 %v2100, %v2096
  %v2241 = vpack.c.b16 %v2105, %v2101
  %v2242 = vpack.c.b16 %v2106, %v2102
  %v2243 = vpack.c.b16 %v2107, %v2103
  %v2244 = vpack.c.b16 %v2108, %v2104
  %v2245 = vpack.c.b16 %v2113, %v2109
  %v2246 = vpack.c.b16 %v2114, %v2110
  %v2247 = vpack.c.b16 %v2115, %v2111
  %v2248 = vpack.c.b16 %v2116, %v2112
  %v2249 = vpack.c.b16 %v2121, %v2117
  %v2250 = vpack.c.b16 %v2122, %v2118
  %v2251 = vpack.c.b16 %v2123, %v2119
  %v2252 = vpack.c.b16 %v2124, %v2120
  %2381 = vmatpush.bf16.msra.mxu0 %v2153
  %2382 = vmatpush.bf16.msra.mxu0 %v2149
  %2383 = vmatpush.bf16.msra.mxu0 %v2145
  %2384 = vmatpush.bf16.msra.mxu0 %v2141
  %2385 = vmatpush.bf16.msra.mxu0 %v2137
  %2386 = vmatpush.bf16.msra.mxu0 %v2133
  %2387 = vmatpush.bf16.msra.mxu0 %v2129
  %2388 = vmatpush.bf16.msra.mxu0 %v2125
  %2389 = vmatmul.bf16.gmra.mxu0 %v1599
  %v2390 = vpop.f32.mrf.mxu0
  %v2391 = vadd.f32 %v1733, %v2390
  %v2392 = vpop.f32.mrf.mxu0
  %2393 = vdwg.mxu0
  %2394 = vmatpush.bf16.msra.mxu0 %v2185
  %2395 = vmatpush.bf16.msra.mxu0 %v2181
  %2396 = vmatpush.bf16.msra.mxu0 %v2177
  %2397 = vmatpush.bf16.msra.mxu0 %v2173
  %2398 = vmatpush.bf16.msra.mxu0 %v2169
  %2399 = vmatpush.bf16.msra.mxu0 %v2165
  %2400 = vmatpush.bf16.msra.mxu0 %v2161
  %2401 = vmatpush.bf16.msra.mxu0 %v2157
  %2402 = vmatmul.bf16.gmra.mxu0 %v1600
  %v2403 = vpop.f32.mrf.mxu0
  %v2404 = vadd.f32 %v2391, %v2403
  %v2405 = vpop.f32.mrf.mxu0
  %2406 = vdwg.mxu0
  %2407 = vmatpush.bf16.msra.mxu0 %v2217
  %2408 = vmatpush.bf16.msra.mxu0 %v2213
  %2409 = vmatpush.bf16.msra.mxu0 %v2209
  %2410 = vmatpush.bf16.msra.mxu0 %v2205
  %2411 = vmatpush.bf16.msra.mxu0 %v2201
  %2412 = vmatpush.bf16.msra.mxu0 %v2197
  %2413 = vmatpush.bf16.msra.mxu0 %v2193
  %2414 = vmatpush.bf16.msra.mxu0 %v2189
  %2415 = vmatmul.bf16.gmra.mxu0 %v1601
  %v2416 = vpop.f32.mrf.mxu0
  %v2417 = vadd.f32 %v2404, %v2416
  %v2418 = vpop.f32.mrf.mxu0
  %2419 = vdwg.mxu0
  %2420 = vmatpush.bf16.msra.mxu0 %v2249
  %2421 = vmatpush.bf16.msra.mxu0 %v2245
  %2422 = vmatpush.bf16.msra.mxu0 %v2241
  %2423 = vmatpush.bf16.msra.mxu0 %v2237
  %2424 = vmatpush.bf16.msra.mxu0 %v2233
  %2425 = vmatpush.bf16.msra.mxu0 %v2229
  %2426 = vmatpush.bf16.msra.mxu0 %v2225
  %2427 = vmatpush.bf16.msra.mxu0 %v2221
  %2428 = vmatmul.bf16.gmra.mxu0 %v1602
  %v2429 = vpop.f32.mrf.mxu0
  %v2430 = vadd.f32 %v2417, %v2429
  %v2431 = vpop.f32.mrf.mxu0
  %2432 = vdwg.mxu0
  %2433 = vmatpush.bf16.msra.mxu0 %v2154
  %2434 = vmatpush.bf16.msra.mxu0 %v2150
  %2435 = vmatpush.bf16.msra.mxu0 %v2146
  %2436 = vmatpush.bf16.msra.mxu0 %v2142
  %2437 = vmatpush.bf16.msra.mxu0 %v2138
  %2438 = vmatpush.bf16.msra.mxu0 %v2134
  %2439 = vmatpush.bf16.msra.mxu0 %v2130
  %2440 = vmatpush.bf16.msra.mxu0 %v2126
  %2441 = vmatmul.bf16.gmra.mxu0 %v1599
  %v2442 = vpop.f32.mrf.mxu0
  %v2443 = vadd.f32 %v1734, %v2442
  %v2444 = vpop.f32.mrf.mxu0
  %2445 = vdwg.mxu0
  %2446 = vmatpush.bf16.msra.mxu0 %v2186
  %2447 = vmatpush.bf16.msra.mxu0 %v2182
  %2448 = vmatpush.bf16.msra.mxu0 %v2178
  %2449 = vmatpush.bf16.msra.mxu0 %v2174
  %2450 = vmatpush.bf16.msra.mxu0 %v2170
  %2451 = vmatpush.bf16.msra.mxu0 %v2166
  %2452 = vmatpush.bf16.msra.mxu0 %v2162
  %2453 = vmatpush.bf16.msra.mxu0 %v2158
  %2454 = vmatmul.bf16.gmra.mxu0 %v1600
  %v2455 = vpop.f32.mrf.mxu0
  %v2456 = vadd.f32 %v2443, %v2455
  %v2457 = vpop.f32.mrf.mxu0
  %2458 = vdwg.mxu0
  %2459 = vmatpush.bf16.msra.mxu0 %v2218
  %2460 = vmatpush.bf16.msra.mxu0 %v2214
  %2461 = vmatpush.bf16.msra.mxu0 %v2210
  %2462 = vmatpush.bf16.msra.mxu0 %v2206
  %2463 = vmatpush.bf16.msra.mxu0 %v2202
  %2464 = vmatpush.bf16.msra.mxu0 %v2198
  %2465 = vmatpush.bf16.msra.mxu0 %v2194
  %2466 = vmatpush.bf16.msra.mxu0 %v2190
  %2467 = vmatmul.bf16.gmra.mxu0 %v1601
  %v2468 = vpop.f32.mrf.mxu0
  %v2469 = vadd.f32 %v2456, %v2468
  %v2470 = vpop.f32.mrf.mxu0
  %2471 = vdwg.mxu0
  %2472 = vmatpush.bf16.msra.mxu0 %v2250
  %2473 = vmatpush.bf16.msra.mxu0 %v2246
  %2474 = vmatpush.bf16.msra.mxu0 %v2242
  %2475 = vmatpush.bf16.msra.mxu0 %v2238
  %2476 = vmatpush.bf16.msra.mxu0 %v2234
  %2477 = vmatpush.bf16.msra.mxu0 %v2230
  %2478 = vmatpush.bf16.msra.mxu0 %v2226
  %2479 = vmatpush.bf16.msra.mxu0 %v2222
  %2480 = vmatmul.bf16.gmra.mxu0 %v1602
  %v2481 = vpop.f32.mrf.mxu0
  %v2482 = vadd.f32 %v2469, %v2481
  %v2483 = vpop.f32.mrf.mxu0
  %2484 = vdwg.mxu0
  %2485 = vmatpush.bf16.msra.mxu0 %v2155
  %2486 = vmatpush.bf16.msra.mxu0 %v2151
  %2487 = vmatpush.bf16.msra.mxu0 %v2147
  %2488 = vmatpush.bf16.msra.mxu0 %v2143
  %2489 = vmatpush.bf16.msra.mxu0 %v2139
  %2490 = vmatpush.bf16.msra.mxu0 %v2135
  %2491 = vmatpush.bf16.msra.mxu0 %v2131
  %2492 = vmatpush.bf16.msra.mxu0 %v2127
  %2493 = vmatmul.bf16.gmra.mxu0 %v1599
  %v2494 = vpop.f32.mrf.mxu0
  %v2495 = vadd.f32 %v1735, %v2494
  %v2496 = vpop.f32.mrf.mxu0
  %2497 = vdwg.mxu0
  %2498 = vmatpush.bf16.msra.mxu0 %v2187
  %2499 = vmatpush.bf16.msra.mxu0 %v2183
  %2500 = vmatpush.bf16.msra.mxu0 %v2179
  %2501 = vmatpush.bf16.msra.mxu0 %v2175
  %2502 = vmatpush.bf16.msra.mxu0 %v2171
  %2503 = vmatpush.bf16.msra.mxu0 %v2167
  %2504 = vmatpush.bf16.msra.mxu0 %v2163
  %2505 = vmatpush.bf16.msra.mxu0 %v2159
  %2506 = vmatmul.bf16.gmra.mxu0 %v1600
  %v2507 = vpop.f32.mrf.mxu0
  %v2508 = vadd.f32 %v2495, %v2507
  %v2509 = vpop.f32.mrf.mxu0
  %2510 = vdwg.mxu0
  %2511 = vmatpush.bf16.msra.mxu0 %v2219
  %2512 = vmatpush.bf16.msra.mxu0 %v2215
  %2513 = vmatpush.bf16.msra.mxu0 %v2211
  %2514 = vmatpush.bf16.msra.mxu0 %v2207
  %2515 = vmatpush.bf16.msra.mxu0 %v2203
  %2516 = vmatpush.bf16.msra.mxu0 %v2199
  %2517 = vmatpush.bf16.msra.mxu0 %v2195
  %2518 = vmatpush.bf16.msra.mxu0 %v2191
  %2519 = vmatmul.bf16.gmra.mxu0 %v1601
  %v2520 = vpop.f32.mrf.mxu0
  %v2521 = vadd.f32 %v2508, %v2520
  %v2522 = vpop.f32.mrf.mxu0
  %2523 = vdwg.mxu0
  %2524 = vmatpush.bf16.msra.mxu0 %v2251
  %2525 = vmatpush.bf16.msra.mxu0 %v2247
  %2526 = vmatpush.bf16.msra.mxu0 %v2243
  %2527 = vmatpush.bf16.msra.mxu0 %v2239
  %2528 = vmatpush.bf16.msra.mxu0 %v2235
  %2529 = vmatpush.bf16.msra.mxu0 %v2231
  %2530 = vmatpush.bf16.msra.mxu0 %v2227
  %2531 = vmatpush.bf16.msra.mxu0 %v2223
  %2532 = vmatmul.bf16.gmra.mxu0 %v1602
  %v2533 = vpop.f32.mrf.mxu0
  %v2534 = vadd.f32 %v2521, %v2533
  %v2535 = vpop.f32.mrf.mxu0
  %2536 = vdwg.mxu0
  %2537 = vmatpush.bf16.msra.mxu0 %v2156
  %2538 = vmatpush.bf16.msra.mxu0 %v2152
  %2539 = vmatpush.bf16.msra.mxu0 %v2148
  %2540 = vmatpush.bf16.msra.mxu0 %v2144
  %2541 = vmatpush.bf16.msra.mxu0 %v2140
  %2542 = vmatpush.bf16.msra.mxu0 %v2136
  %2543 = vmatpush.bf16.msra.mxu0 %v2132
  %2544 = vmatpush.bf16.msra.mxu0 %v2128
  %2545 = vmatmul.bf16.gmra.mxu0 %v1599
  %v2546 = vpop.f32.mrf.mxu0
  %v2547 = vadd.f32 %v1736, %v2546
  %v2548 = vpop.f32.mrf.mxu0
  %2549 = vdwg.mxu0
  %2550 = vmatpush.bf16.msra.mxu0 %v2188
  %2551 = vmatpush.bf16.msra.mxu0 %v2184
  %2552 = vmatpush.bf16.msra.mxu0 %v2180
  %2553 = vmatpush.bf16.msra.mxu0 %v2176
  %2554 = vmatpush.bf16.msra.mxu0 %v2172
  %2555 = vmatpush.bf16.msra.mxu0 %v2168
  %2556 = vmatpush.bf16.msra.mxu0 %v2164
  %2557 = vmatpush.bf16.msra.mxu0 %v2160
  %2558 = vmatmul.bf16.gmra.mxu0 %v1600
  %v2559 = vpop.f32.mrf.mxu0
  %v2560 = vadd.f32 %v2547, %v2559
  %v2561 = vpop.f32.mrf.mxu0
  %2562 = vdwg.mxu0
  %2563 = vmatpush.bf16.msra.mxu0 %v2220
  %2564 = vmatpush.bf16.msra.mxu0 %v2216
  %2565 = vmatpush.bf16.msra.mxu0 %v2212
  %2566 = vmatpush.bf16.msra.mxu0 %v2208
  %2567 = vmatpush.bf16.msra.mxu0 %v2204
  %2568 = vmatpush.bf16.msra.mxu0 %v2200
  %2569 = vmatpush.bf16.msra.mxu0 %v2196
  %2570 = vmatpush.bf16.msra.mxu0 %v2192
  %2571 = vmatmul.bf16.gmra.mxu0 %v1601
  %v2572 = vpop.f32.mrf.mxu0
  %v2573 = vadd.f32 %v2560, %v2572
  %v2574 = vpop.f32.mrf.mxu0
  %2575 = vdwg.mxu0
  %2576 = vmatpush.bf16.msra.mxu0 %v2252
  %2577 = vmatpush.bf16.msra.mxu0 %v2248
  %2578 = vmatpush.bf16.msra.mxu0 %v2244
  %2579 = vmatpush.bf16.msra.mxu0 %v2240
  %2580 = vmatpush.bf16.msra.mxu0 %v2236
  %2581 = vmatpush.bf16.msra.mxu0 %v2232
  %2582 = vmatpush.bf16.msra.mxu0 %v2228
  %2583 = vmatpush.bf16.msra.mxu0 %v2224
  %2584 = vmatmul.bf16.gmra.mxu0 %v1602
  %v2585 = vpop.f32.mrf.mxu0
  %v2586 = vadd.f32 %v2573, %v2585
  %v2587 = vpop.f32.mrf.mxu0
  %2588 = vdwg.mxu0
  %v2589 = vmax.f32 %v2430, 0.0
  %v2590 = vmax.f32 %v2482, 0.0
  %v2591 = vmax.f32 %v2534, 0.0
  %v2592 = vmax.f32 %v2586, 0.0
  %v2593 = vpack.c.bf16 %v2589, %v2589
  %v2594 = vpack.c.bf16 %v2590, %v2590
  %v2595 = vpack.c.bf16 %v2591, %v2591
  %v2596 = vpack.c.bf16 %v2592, %v2592
  %v2597 = vld [vmem:[%s5] sm:$0xf]
  %v2598 = vld [vmem:[%s5 + $0x4] sm:$0xf]
  %v2599 = vld [vmem:[%s5 + $0x8] sm:$0xf]
  %v2600 = vld [vmem:[%s5 + $0xc] sm:$0xf]
  %v2601 = vld [vmem:[%s5 + $0x10] sm:$0xf]
  %v2602 = vld [vmem:[%s5 + $0x14] sm:$0xf]
  %v2603 = vld [vmem:[%s5 + $0x18] sm:$0xf]
  %v2604 = vld [vmem:[%s5 + $0x1c] sm:$0xf]
  %v2605 = vld [vmem:[%s5 + $0x20] sm:$0xf]
  %v2606 = vld [vmem:[%s5 + $0x24] sm:$0xf]
  %v2607 = vld [vmem:[%s5 + $0x28] sm:$0xf]
  %v2608 = vld [vmem:[%s5 + $0x2c] sm:$0xf]
  %v2609 = vld [vmem:[%s5 + $0x30] sm:$0xf]
  %v2610 = vld [vmem:[%s5 + $0x34] sm:$0xf]
  %v2611 = vld [vmem:[%s5 + $0x38] sm:$0xf]
  %v2612 = vld [vmem:[%s5 + $0x3c] sm:$0xf]
  %v2613 = vld [vmem:[%s5 + $0x40] sm:$0xf]
  %v2614 = vld [vmem:[%s5 + $0x44] sm:$0xf]
  %v2615 = vld [vmem:[%s5 + $0x48] sm:$0xf]
  %v2616 = vld [vmem:[%s5 + $0x4c] sm:$0xf]
  %v2617 = vld [vmem:[%s5 + $0x50] sm:$0xf]
  %v2618 = vld [vmem:[%s5 + $0x54] sm:$0xf]
  %v2619 = vld [vmem:[%s5 + $0x58] sm:$0xf]
  %v2620 = vld [vmem:[%s5 + $0x5c] sm:$0xf]
  %v2621 = vld [vmem:[%s5 + $0x60] sm:$0xf]
  %v2622 = vld [vmem:[%s5 + $0x64] sm:$0xf]
  %v2623 = vld [vmem:[%s5 + $0x68] sm:$0xf]
  %v2624 = vld [vmem:[%s5 + $0x6c] sm:$0xf]
  %v2625 = vld [vmem:[%s5 + $0x70] sm:$0xf]
  %v2626 = vld [vmem:[%s5 + $0x74] sm:$0xf]
  %v2627 = vld [vmem:[%s5 + $0x78] sm:$0xf]
  %v2628 = vld [vmem:[%s5 + $0x7c] sm:$0xf]
  %v2629 = vld [vmem:[%s5 + $0x80] sm:$0xf]
  %v2630 = vld [vmem:[%s5 + $0x84] sm:$0xf]
  %v2631 = vld [vmem:[%s5 + $0x88] sm:$0xf]
  %v2632 = vld [vmem:[%s5 + $0x8c] sm:$0xf]
  %v2633 = vld [vmem:[%s5 + $0x90] sm:$0xf]
  %v2634 = vld [vmem:[%s5 + $0x94] sm:$0xf]
  %v2635 = vld [vmem:[%s5 + $0x98] sm:$0xf]
  %v2636 = vld [vmem:[%s5 + $0x9c] sm:$0xf]
  %v2637 = vld [vmem:[%s5 + $0xa0] sm:$0xf]
  %v2638 = vld [vmem:[%s5 + $0xa4] sm:$0xf]
  %v2639 = vld [vmem:[%s5 + $0xa8] sm:$0xf]
  %v2640 = vld [vmem:[%s5 + $0xac] sm:$0xf]
  %v2641 = vld [vmem:[%s5 + $0xb0] sm:$0xf]
  %v2642 = vld [vmem:[%s5 + $0xb4] sm:$0xf]
  %v2643 = vld [vmem:[%s5 + $0xb8] sm:$0xf]
  %v2644 = vld [vmem:[%s5 + $0xbc] sm:$0xf]
  %v2645 = vld [vmem:[%s5 + $0xc0] sm:$0xf]
  %v2646 = vld [vmem:[%s5 + $0xc4] sm:$0xf]
  %v2647 = vld [vmem:[%s5 + $0xc8] sm:$0xf]
  %v2648 = vld [vmem:[%s5 + $0xcc] sm:$0xf]
  %v2649 = vld [vmem:[%s5 + $0xd0] sm:$0xf]
  %v2650 = vld [vmem:[%s5 + $0xd4] sm:$0xf]
  %v2651 = vld [vmem:[%s5 + $0xd8] sm:$0xf]
  %v2652 = vld [vmem:[%s5 + $0xdc] sm:$0xf]
  %v2653 = vld [vmem:[%s5 + $0xe0] sm:$0xf]
  %v2654 = vld [vmem:[%s5 + $0xe4] sm:$0xf]
  %v2655 = vld [vmem:[%s5 + $0xe8] sm:$0xf]
  %v2656 = vld [vmem:[%s5 + $0xec] sm:$0xf]
  %v2657 = vld [vmem:[%s5 + $0xf0] sm:$0xf]
  %v2658 = vld [vmem:[%s5 + $0xf4] sm:$0xf]
  %v2659 = vld [vmem:[%s5 + $0xf8] sm:$0xf]
  %v2660 = vld [vmem:[%s5 + $0xfc] sm:$0xf]
  %v2661 = vld [vmem:[%s6] sm:$0x1]
  %v2663 = vperm.slane %v2661, 0
  %v2729 = vunpack.c.l.b16 %v2597
  %v2730 = vunpack.c.l.b16 %v2598
  %v2731 = vunpack.c.l.b16 %v2599
  %v2732 = vunpack.c.l.b16 %v2600
  %v2733 = vunpack.c.l.b16 %v2601
  %v2734 = vunpack.c.l.b16 %v2602
  %v2735 = vunpack.c.l.b16 %v2603
  %v2736 = vunpack.c.l.b16 %v2604
  %v2737 = vunpack.c.l.b16 %v2605
  %v2738 = vunpack.c.l.b16 %v2606
  %v2739 = vunpack.c.l.b16 %v2607
  %v2740 = vunpack.c.l.b16 %v2608
  %v2741 = vunpack.c.l.b16 %v2609
  %v2742 = vunpack.c.l.b16 %v2610
  %v2743 = vunpack.c.l.b16 %v2611
  %v2744 = vunpack.c.l.b16 %v2612
  %v2745 = vunpack.c.l.b16 %v2613
  %v2746 = vunpack.c.l.b16 %v2614
  %v2747 = vunpack.c.l.b16 %v2615
  %v2748 = vunpack.c.l.b16 %v2616
  %v2749 = vunpack.c.l.b16 %v2617
  %v2750 = vunpack.c.l.b16 %v2618
  %v2751 = vunpack.c.l.b16 %v2619
  %v2752 = vunpack.c.l.b16 %v2620
  %v2753 = vunpack.c.l.b16 %v2621
  %v2754 = vunpack.c.l.b16 %v2622
  %v2755 = vunpack.c.l.b16 %v2623
  %v2756 = vunpack.c.l.b16 %v2624
  %v2757 = vunpack.c.l.b16 %v2625
  %v2758 = vunpack.c.l.b16 %v2626
  %v2759 = vunpack.c.l.b16 %v2627
  %v2760 = vunpack.c.l.b16 %v2628
  %v2761 = vunpack.c.l.b16 %v2629
  %v2762 = vunpack.c.l.b16 %v2630
  %v2763 = vunpack.c.l.b16 %v2631
  %v2764 = vunpack.c.l.b16 %v2632
  %v2765 = vunpack.c.l.b16 %v2633
  %v2766 = vunpack.c.l.b16 %v2634
  %v2767 = vunpack.c.l.b16 %v2635
  %v2768 = vunpack.c.l.b16 %v2636
  %v2769 = vunpack.c.l.b16 %v2637
  %v2770 = vunpack.c.l.b16 %v2638
  %v2771 = vunpack.c.l.b16 %v2639
  %v2772 = vunpack.c.l.b16 %v2640
  %v2773 = vunpack.c.l.b16 %v2641
  %v2774 = vunpack.c.l.b16 %v2642
  %v2775 = vunpack.c.l.b16 %v2643
  %v2776 = vunpack.c.l.b16 %v2644
  %v2777 = vunpack.c.l.b16 %v2645
  %v2778 = vunpack.c.l.b16 %v2646
  %v2779 = vunpack.c.l.b16 %v2647
  %v2780 = vunpack.c.l.b16 %v2648
  %v2781 = vunpack.c.l.b16 %v2649
  %v2782 = vunpack.c.l.b16 %v2650
  %v2783 = vunpack.c.l.b16 %v2651
  %v2784 = vunpack.c.l.b16 %v2652
  %v2785 = vunpack.c.l.b16 %v2653
  %v2786 = vunpack.c.l.b16 %v2654
  %v2787 = vunpack.c.l.b16 %v2655
  %v2788 = vunpack.c.l.b16 %v2656
  %v2789 = vunpack.c.l.b16 %v2657
  %v2790 = vunpack.c.l.b16 %v2658
  %v2791 = vunpack.c.l.b16 %v2659
  %v2792 = vunpack.c.l.b16 %v2660
  %v2793 = vpack.c.b16 %v2730, %v2729
  %v2794 = vpack.c.b16 %v2732, %v2731
  %v2795 = vpack.c.b16 %v2734, %v2733
  %v2796 = vpack.c.b16 %v2736, %v2735
  %v2797 = vpack.c.b16 %v2738, %v2737
  %v2798 = vpack.c.b16 %v2740, %v2739
  %v2799 = vpack.c.b16 %v2742, %v2741
  %v2800 = vpack.c.b16 %v2744, %v2743
  %v2801 = vpack.c.b16 %v2746, %v2745
  %v2802 = vpack.c.b16 %v2748, %v2747
  %v2803 = vpack.c.b16 %v2750, %v2749
  %v2804 = vpack.c.b16 %v2752, %v2751
  %v2805 = vpack.c.b16 %v2754, %v2753
  %v2806 = vpack.c.b16 %v2756, %v2755
  %v2807 = vpack.c.b16 %v2758, %v2757
  %v2808 = vpack.c.b16 %v2760, %v2759
  %v2809 = vpack.c.b16 %v2762, %v2761
  %v2810 = vpack.c.b16 %v2764, %v2763
  %v2811 = vpack.c.b16 %v2766, %v2765
  %v2812 = vpack.c.b16 %v2768, %v2767
  %v2813 = vpack.c.b16 %v2770, %v2769
  %v2814 = vpack.c.b16 %v2772, %v2771
  %v2815 = vpack.c.b16 %v2774, %v2773
  %v2816 = vpack.c.b16 %v2776, %v2775
  %v2817 = vpack.c.b16 %v2778, %v2777
  %v2818 = vpack.c.b16 %v2780, %v2779
  %v2819 = vpack.c.b16 %v2782, %v2781
  %v2820 = vpack.c.b16 %v2784, %v2783
  %v2821 = vpack.c.b16 %v2786, %v2785
  %v2822 = vpack.c.b16 %v2788, %v2787
  %v2823 = vpack.c.b16 %v2790, %v2789
  %v2824 = vpack.c.b16 %v2792, %v2791
  %2857 = vmatpush.bf16.msra.mxu0 %v2800
  %2858 = vmatpush.bf16.msra.mxu0 %v2799
  %2859 = vmatpush.bf16.msra.mxu0 %v2798
  %2860 = vmatpush.bf16.msra.mxu0 %v2797
  %2861 = vmatpush.bf16.msra.mxu0 %v2796
  %2862 = vmatpush.bf16.msra.mxu0 %v2795
  %2863 = vmatpush.bf16.msra.mxu0 %v2794
  %2864 = vmatpush.bf16.msra.mxu0 %v2793
  %2865 = vmatmul.bf16.gmra.mxu0 %v2593
  %v2866 = vpop.f32.mrf.mxu0
  %v2867 = vadd.f32 %v2663, %v2866
  %v2868 = vpop.f32.mrf.mxu0
  %2869 = vdwg.mxu0
  %2870 = vmatpush.bf16.msra.mxu0 %v2808
  %2871 = vmatpush.bf16.msra.mxu0 %v2807
  %2872 = vmatpush.bf16.msra.mxu0 %v2806
  %2873 = vmatpush.bf16.msra.mxu0 %v2805
  %2874 = vmatpush.bf16.msra.mxu0 %v2804
  %2875 = vmatpush.bf16.msra.mxu0 %v2803
  %2876 = vmatpush.bf16.msra.mxu0 %v2802
  %2877 = vmatpush.bf16.msra.mxu0 %v2801
  %2878 = vmatmul.bf16.gmra.mxu0 %v2594
  %v2879 = vpop.f32.mrf.mxu0
  %v2880 = vadd.f32 %v2867, %v2879
  %v2881 = vpop.f32.mrf.mxu0
  %2882 = vdwg.mxu0
  %2883 = vmatpush.bf16.msra.mxu0 %v2816
  %2884 = vmatpush.bf16.msra.mxu0 %v2815
  %2885 = vmatpush.bf16.msra.mxu0 %v2814
  %2886 = vmatpush.bf16.msra.mxu0 %v2813
  %2887 = vmatpush.bf16.msra.mxu0 %v2812
  %2888 = vmatpush.bf16.msra.mxu0 %v2811
  %2889 = vmatpush.bf16.msra.mxu0 %v2810
  %2890 = vmatpush.bf16.msra.mxu0 %v2809
  %2891 = vmatmul.bf16.gmra.mxu0 %v2595
  %v2892 = vpop.f32.mrf.mxu0
  %v2893 = vadd.f32 %v2880, %v2892
  %v2894 = vpop.f32.mrf.mxu0
  %2895 = vdwg.mxu0
  %2896 = vmatpush.bf16.msra.mxu0 %v2824
  %2897 = vmatpush.bf16.msra.mxu0 %v2823
  %2898 = vmatpush.bf16.msra.mxu0 %v2822
  %2899 = vmatpush.bf16.msra.mxu0 %v2821
  %2900 = vmatpush.bf16.msra.mxu0 %v2820
  %2901 = vmatpush.bf16.msra.mxu0 %v2819
  %2902 = vmatpush.bf16.msra.mxu0 %v2818
  %2903 = vmatpush.bf16.msra.mxu0 %v2817
  %2904 = vmatmul.bf16.gmra.mxu0 %v2596
  %v2905 = vpop.f32.mrf.mxu0
  %v2906 = vadd.f32 %v2893, %v2905
  %v2907 = vpop.f32.mrf.mxu0
  %2908 = vdwg.mxu0
  %2909 = vst [vmem:[%s7] sm:$0xff] %v2906
  // Predicated region
  $region30: #{mlp_forward.1} parent=0 // pred_check
    _
  $region31: #{mlp_forward.1} parent=0 // pred_check_branch
    %2911 = sbr.rel (0) target = $region33
  $region32: #{mlp_forward.1} parent=0 // pred_region
    _
  $region33: #{mlp_forward.1} parent=0 // pred_fallthru
    _
  // Predicated region
  $region34: #{mlp_forward.1} parent=0 // pred_check
    _
  $region35: #{mlp_forward.1} parent=0 // pred_check_branch
    %2913 = sbr.rel (0) target = $region37
  $region36: #{mlp_forward.1} parent=0 // pred_region
    _
  $region37: #{mlp_forward.1} parent=0 // pred_fallthru
    _

</llo_original>
